<compile_context>
chip_gen: v7x
topology: tpu7x:2x2x1
jax: 0.10.0
libtpu: 0.0.40
codegen_flags: <defaults>
</compile_context>

<pallas_src>
import math

import jax
import jax.numpy as jnp
from jax.experimental import pallas as pl
from jax.experimental.pallas import tpu as pltpu


def _round_up(x, m):
    return ((x + m - 1) // m) * m


def _row_align(dtype):
    # Minimum sublane multiple for the dtype's native (sublane, 128) tile.
    return max(8, 32 // jnp.dtype(dtype).itemsize)


def _fold_bn(params, eps=1e-5):
    """Fold Conv1d(k=1) bias + eval-mode BatchNorm into effective W / b (f32)."""
    eff_w, eff_b = [], []
    for p in params:
        scale = (p["gamma"].astype(jnp.float32)
                 / jnp.sqrt(p["var"].astype(jnp.float32) + eps))          # [C_out]
        eff_w.append(p["w"].astype(jnp.float32).T * scale[None, :])       # [C_in, C_out]
        eff_b.append(((p["b"].astype(jnp.float32) - p["mean"].astype(jnp.float32))
                      * scale + p["beta"].astype(jnp.float32)).reshape(1, -1))
    return eff_w, eff_b


def _make_mlp_kernel(num_layers, compute_dtype, pack):
    """Kernel refs: (p1, p2, [w_i, b_i] * num_layers, out)."""

    def kernel(*refs):
        p1_ref, p2_ref = refs[0], refs[1]
        wb = refs[2:2 + 2 * num_layers]
        o_ref = refs[2 + 2 * num_layers]

        # Layer 0: single K = D1 + D2 dot from a lane-concat of the two halves.
        x = jnp.concatenate([p1_ref[...].astype(compute_dtype),
                             p2_ref[...].astype(compute_dtype)], axis=-1)
        h = None
        for li in range(num_layers):
            w_ref, b_ref = wb[2 * li], wb[2 * li + 1]
            a = x if li == 0 else h.astype(compute_dtype)   # bf16 MXU operands
            h = jnp.dot(a, w_ref[...], preferred_element_type=jnp.float32)
            h = jnp.maximum(h + b_ref[...], 0.0)            # f32 bias + ReLU epilogue

        if pack > 1:                                        # lane-dense output slab
            h = h.reshape(h.shape[0] // pack, pack * h.shape[1])
        o_ref[...] = h.astype(o_ref.dtype)

    return kernel


def fea_propagate_forward(points1, points2, params, *, tile_m=None, eps=1e-5,
                          out_dtype=None, compute_dtype=jnp.bfloat16):
    """
    points1: [B, N, D1]   points2: [B, N, D2]   (feature-axis concat layout)
    params : list of per-layer dicts with keys
             w [C_out, C_in], b [C_out], gamma, beta, mean, var [C_out]
    returns: [B, N, mlp[-1]] in points1.dtype (or out_dtype if given)
    """
    B, N, D1 = points1.shape
    B2, N2, D2 = points2.shape
    assert (B2, N2) == (B, N), "points1/points2 must share (B, N)"
    M = B * N
    io_dtype = points1.dtype
    out_dtype = out_dtype or io_dtype

    # ---- fold conv bias + eval-BN; weights travel in the MXU operand dtype ----
    eff_w_f32, eff_b = _fold_bn(params, eps)
    eff_w = [w.astype(compute_dtype) for w in eff_w_f32]
    num_layers = len(params)
    widths = [w.shape[1] for w in eff_w]
    C_out = widths[-1]
    max_w = max(widths)

    # ---- lane-dense output packing for narrow last layers ---------------------
    pack = 128 // C_out if (C_out < 128 and 128 % C_out == 0) else 1

    # ---- generation-aware tile / VMEM budget ----------------------------------
    try:
        vmem_cap = int(getattr(pltpu.get_tpu_info(), "vmem_capacity_bytes",
                               64 * 1024 * 1024))
    except Exception:
        vmem_cap = 64 * 1024 * 1024                     # safe lower bound (v7x)

    in_itemsize = jnp.dtype(io_dtype).itemsize
    out_itemsize = jnp.dtype(out_dtype).itemsize
    comp_itemsize = jnp.dtype(compute_dtype).itemsize
    align = math.lcm(_row_align(io_dtype), pack * _row_align(out_dtype))

    wt_bytes = (sum(int(w.size) * comp_itemsize for w in eff_w)
                + sum(int(b.size) * 4 for b in eff_b))
    per_row = (2 * (D1 + D2) * in_itemsize              # double-buffered input tiles
               + 2 * C_out * out_itemsize               # double-buffered output tile
               + (D1 + D2) * comp_itemsize              # in-kernel concat operand
               + 2 * max_w * 4                          # f32 intermediates
               + max_w * comp_itemsize)                 # cast copy feeding the MXU
    budget = int(0.75 * vmem_cap) - 2 * wt_bytes - (2 << 20)
    cap_vmem = max(align, (max(budget, 0) // per_row) // align * align)

    if tile_m is None:
        # Big tiles on 128 MiB parts (v5e/v6e), smaller on v7x's 64 MiB; but keep
        # >= 4 blocks so the "parallel" M axis feeds both v7x TensorCores.
        tile_m = 4096 if vmem_cap >= 96 * 1024 * 1024 else 2048
        tile_m = min(tile_m, _round_up(max(1, -(-M // 4)), align))
    tile_m = max(align, min(_round_up(int(tile_m), align), cap_vmem))
    num_blocks = -(-M // tile_m)

    need = per_row * tile_m + 2 * wt_bytes
    vmem_limit = int(min(max(2 * need, 32 * 1024 * 1024), int(0.9 * vmem_cap)))
    vmem_limit = max(vmem_limit, min(need + (1 << 20), int(0.95 * vmem_cap)))

    # ---- inputs / outputs (no HBM pad: Pallas clips ragged edge blocks) -------
    p1 = points1.reshape(M, D1)
    p2 = points2.reshape(M, D2)
    if pack > 1:
        rows_packed = -(-M // pack)
        out_shape2d = (rows_packed, pack * C_out)       # lane-dense (last dim 128)
        out_block = (tile_m // pack, pack * C_out)
    else:
        out_shape2d = (M, C_out)
        out_block = (tile_m, C_out)

    kernel = _make_mlp_kernel(num_layers, compute_dtype, pack)
    wb_flat = []
    for li in range(num_layers):
        wb_flat += [eff_w[li], eff_b[li]]

    full_widths = [D1 + D2] + widths
    flops = 2 * M * sum(full_widths[i] * full_widths[i + 1] for i in range(num_layers))
    bytes_accessed = (M * (D1 + D2) * in_itemsize + wt_bytes + M * C_out * out_itemsize)
    cost = pl.CostEstimate(flops=int(flops), transcendentals=0,
                           bytes_accessed=int(bytes_accessed))

    def _run(single_buffer_weights):
        in_specs = [pl.BlockSpec((tile_m, D1), lambda i: (i, 0)),
                    pl.BlockSpec((tile_m, D2), lambda i: (i, 0))]
        for arr in wb_flat:
            if single_buffer_weights:
                # Grid-invariant operands: don't waste VMEM double-buffering them.
                in_specs.append(pl.BlockSpec(arr.shape, lambda i: (0, 0),
                                             pipeline_mode=pl.Buffered(1)))
            else:
                in_specs.append(pl.BlockSpec(arr.shape, lambda i: (0, 0)))
        return pl.pallas_call(
            kernel,
            out_shape=jax.ShapeDtypeStruct(out_shape2d, out_dtype),
            grid=(num_blocks,),
            in_specs=in_specs,
            out_specs=pl.BlockSpec(out_block, lambda i: (i, 0)),
            compiler_params=pltpu.CompilerParams(
                dimension_semantics=("parallel",),      # shard M tiles across TCs
                vmem_limit_bytes=vmem_limit),
            cost_estimate=cost,
        )(p1, p2, *wb_flat)

    try:
        out2d = _run(True)
    except Exception:   # pipeline_mode=Buffered(1) unsupported -> plain specs
        out2d = _run(False)

    if pack > 1:
        out2d = out2d.reshape(-1, C_out)
        if out2d.shape[0] != M:     # ragged tail rows inside the last packed row
            out2d = out2d[:M]
    return out2d.reshape(B, N, C_out)


# --------------------------- references & demo --------------------------------
def _reference_forward(points1, points2, params, eps=1e-5):
    """Pure-f32 JAX reference mimicking the PyTorch forward (eval-mode BN)."""
    x = jnp.concatenate([points1.astype(jnp.float32),
                         points2.astype(jnp.float32)], axis=-1)   # [B, N, C]
    x = jnp.transpose(x, (0, 2, 1))                               # [B, C, N]
    for p in params:
        x = jnp.einsum("oc,bcn->bon", p["w"], x,
                       precision=jax.lax.Precision.HIGHEST) + p["b"][None, :, None]
        x = (x - p["mean"][None, :, None]) / jnp.sqrt(p["var"][None, :, None] + eps)
        x = x * p["gamma"][None, :, None] + p["beta"][None, :, None]
        x = jnp.maximum(x, 0.0)
    return jnp.transpose(x, (0, 2, 1))                            # [B, N, C_out]


def _reference_matched(points1, points2, params, compute_dtype, eps=1e-5):
    """Reference using the same BN folding and MXU operand dtype as the kernel."""
    eff_w, eff_b = _fold_bn(params, eps)
    B, N, _ = points1.shape
    x = jnp.concatenate([points1, points2], axis=-1).reshape(B * N, -1)
    x = x.astype(jnp.float32)
    for w, b in zip(eff_w, eff_b):
        h = jnp.dot(x.astype(compute_dtype), w.astype(compute_dtype),
                    preferred_element_type=jnp.float32)
        x = jnp.maximum(h + b, 0.0)
    return x.reshape(B, N, -1)


def _make_params(key, in_channel, mlp):
    params = []
    last = in_channel
    for out_c in mlp:
        key, kw, kb, kg, kbe, km, kv = jax.random.split(key, 7)
        params.append(dict(
            w=0.1 * jax.random.normal(kw, (out_c, last), jnp.float32),
            b=0.1 * jax.random.normal(kb, (out_c,), jnp.float32),
            gamma=1.0 + 0.1 * jax.random.normal(kg, (out_c,), jnp.float32),
            beta=0.1 * jax.random.normal(kbe, (out_c,), jnp.float32),
            mean=0.1 * jax.random.normal(km, (out_c,), jnp.float32),
            var=jnp.abs(jax.random.normal(kv, (out_c,), jnp.float32)) + 0.5,
        ))
        last = out_c
    return params, key


if __name__ == "__main__":
    key = jax.random.PRNGKey(0)

    # --- Config A: f32 I/O, lane-dense C_out = 128, M divides the tile -------
    B, N, D1, D2 = 2, 512, 64, 64
    mlp = [128, 128]
    key, k1, k2 = jax.random.split(key, 3)
    p1 = jax.random.normal(k1, (B, N, D1), jnp.float32)
    p2 = jax.random.normal(k2, (B, N, D2), jnp.float32)
    params, key = _make_params(key, D1 + D2, mlp)

    out = fea_propagate_forward(p1, p2, params)
    jax.block_until_ready(out)
    assert out.shape == (B, N, mlp[-1])
    ref_m = _reference_matched(p1, p2, params, jnp.bfloat16)
    ref_f = _reference_forward(p1, p2, params)
    assert jnp.allclose(out, ref_m, atol=1e-2, rtol=1e-2), "config A: kernel math mismatch"
    assert jnp.allclose(out, ref_f, atol=1e-1, rtol=1e-1), "config A: drift vs f32 reference"

    # --- Config B: bf16 I/O, narrow C_out (packed output), ragged M ----------
    B, N, D1, D2 = 2, 999, 32, 32
    mlp = [64, 32]
    key, k1, k2 = jax.random.split(key, 3)
    p1b = jax.random.normal(k1, (B, N, D1), jnp.float32).astype(jnp.bfloat16)
    p2b = jax.random.normal(k2, (B, N, D2), jnp.float32).astype(jnp.bfloat16)
    params_b, key = _make_params(key, D1 + D2, mlp)

    out_b = fea_propagate_forward(p1b, p2b, params_b)
    jax.block_until_ready(out_b)
    assert out_b.shape == (B, N, mlp[-1])
    ref_mb = _reference_matched(p1b, p2b, params_b, jnp.bfloat16)
    ref_fb = _reference_forward(p1b.astype(jnp.float32), p2b.astype(jnp.float32), params_b)
    assert jnp.allclose(out_b.astype(jnp.float32), ref_mb, atol=2e-2, rtol=2e-2), \
        "config B: kernel math mismatch"
    assert jnp.allclose(out_b.astype(jnp.float32), ref_fb, atol=1e-1, rtol=1e-1), \
        "config B: drift vs f32 reference"

    print("KERNEL_OK")
</pallas_src>

<mosaic_0001>
module attributes {stable_mosaic.version = 11 : i64} {
  func.func @kernel(%arg0: i32, %arg1: memref<256x64xf32, #tpu.memory_space<vmem>>, %arg2: memref<256x64xf32, #tpu.memory_space<vmem>>, %arg3: memref<128x128xbf16, #tpu.memory_space<vmem>>, %arg4: memref<1x128xf32, #tpu.memory_space<vmem>>, %arg5: memref<128x128xbf16, #tpu.memory_space<vmem>>, %arg6: memref<1x128xf32, #tpu.memory_space<vmem>>, %arg7: memref<256x128xf32, #tpu.memory_space<vmem>>) attributes {dimension_semantics = [#tpu.dimension_semantics<parallel>], iteration_bounds = array<i64: 4>, scalar_prefetch = 0 : i64, scratch_operands = 0 : i64, tpu.core_type = #tpu.core_type<tc>, window_params = [{transform_indices = @transform_0, window_bounds = array<i64: 256, 64>}, {transform_indices = @transform_1, window_bounds = array<i64: 256, 64>}, {pipeline_mode = #tpu.pipeline_mode<synchronous>, transform_indices = @transform_2, window_bounds = array<i64: 128, 128>}, {pipeline_mode = #tpu.pipeline_mode<synchronous>, transform_indices = @transform_3, window_bounds = array<i64: 1, 128>}, {pipeline_mode = #tpu.pipeline_mode<synchronous>, transform_indices = @transform_4, window_bounds = array<i64: 128, 128>}, {pipeline_mode = #tpu.pipeline_mode<synchronous>, transform_indices = @transform_5, window_bounds = array<i64: 1, 128>}, {transform_indices = @transform_6, window_bounds = array<i64: 256, 128>}]} {
    %c0 = arith.constant 0 : index
    %c0_0 = arith.constant 0 : index
    %0 = vector.load %arg1[%c0, %c0_0] : memref<256x64xf32, #tpu.memory_space<vmem>>, vector<256x64xf32>
    %1 = arith.truncf %0 : vector<256x64xf32> to vector<256x64xbf16>
    %c0_1 = arith.constant 0 : index
    %c0_2 = arith.constant 0 : index
    %2 = vector.load %arg2[%c0_1, %c0_2] : memref<256x64xf32, #tpu.memory_space<vmem>>, vector<256x64xf32>
    %3 = arith.truncf %2 : vector<256x64xf32> to vector<256x64xbf16>
    %4 = tpu.concatenate %1, %3 in 1 : vector<256x64xbf16>, vector<256x64xbf16> -> vector<256x128xbf16>
    %c0_3 = arith.constant 0 : index
    %c0_4 = arith.constant 0 : index
    %5 = vector.load %arg3[%c0_3, %c0_4] : memref<128x128xbf16, #tpu.memory_space<vmem>>, vector<128x128xbf16>
    %cst = arith.constant dense<0.000000e+00> : vector<256x128xf32>
    %6 = tpu.matmul %4, %5, %cst {dimension_numbers = #tpu.dot_dimension_numbers<[1], [0], [0], [1], [0, 0, 1, 1], [], []>} : vector<256x128xbf16>, vector<128x128xbf16>, vector<256x128xf32> -> vector<256x128xf32>
    %c0_5 = arith.constant 0 : index
    %c0_6 = arith.constant 0 : index
    %7 = vector.load %arg4[%c0_5, %c0_6] : memref<1x128xf32, #tpu.memory_space<vmem>>, vector<1x128xf32>
    %8 = vector.broadcast %7 : vector<1x128xf32> to vector<256x128xf32>
    %9 = arith.addf %6, %8 : vector<256x128xf32>
    %cst_7 = arith.constant 0.000000e+00 : f32
    %10 = vector.broadcast %cst_7 : f32 to vector<256x128xf32>
    %11 = arith.maximumf %9, %10 : vector<256x128xf32>
    %12 = arith.truncf %11 : vector<256x128xf32> to vector<256x128xbf16>
    %c0_8 = arith.constant 0 : index
    %c0_9 = arith.constant 0 : index
    %13 = vector.load %arg5[%c0_8, %c0_9] : memref<128x128xbf16, #tpu.memory_space<vmem>>, vector<128x128xbf16>
    %cst_10 = arith.constant dense<0.000000e+00> : vector<256x128xf32>
    %14 = tpu.matmul %12, %13, %cst_10 {dimension_numbers = #tpu.dot_dimension_numbers<[1], [0], [0], [1], [0, 0, 1, 1], [], []>} : vector<256x128xbf16>, vector<128x128xbf16>, vector<256x128xf32> -> vector<256x128xf32>
    %c0_11 = arith.constant 0 : index
    %c0_12 = arith.constant 0 : index
    %15 = vector.load %arg6[%c0_11, %c0_12] : memref<1x128xf32, #tpu.memory_space<vmem>>, vector<1x128xf32>
    %16 = vector.broadcast %15 : vector<1x128xf32> to vector<256x128xf32>
    %17 = arith.addf %14, %16 : vector<256x128xf32>
    %cst_13 = arith.constant 0.000000e+00 : f32
    %18 = vector.broadcast %cst_13 : f32 to vector<256x128xf32>
    %19 = arith.maximumf %17, %18 : vector<256x128xf32>
    %c0_14 = arith.constant 0 : index
    %c0_15 = arith.constant 0 : index
    %20 = vector.load %arg7[%c0_14, %c0_15] : memref<256x128xf32, #tpu.memory_space<vmem>>, vector<256x128xf32>
    tpu.vector_store %arg7[%c0_14, %c0_15], %19 {strides = array<i32>} : memref<256x128xf32, #tpu.memory_space<vmem>>, vector<256x128xf32>,
    return
  }
  func.func @transform_0(%arg0: i32) -> (i32, i32) {
    %c0_i32 = arith.constant 0 : i32
    %c0_i32_0 = arith.constant 0 : i32
    return %arg0, %c0_i32 : i32, i32
  }
  func.func @transform_1(%arg0: i32) -> (i32, i32) {
    %c0_i32 = arith.constant 0 : i32
    %c0_i32_0 = arith.constant 0 : i32
    return %arg0, %c0_i32 : i32, i32
  }
  func.func @transform_2(%arg0: i32) -> (i32, i32) {
    %c0_i32 = arith.constant 0 : i32
    %c0_i32_0 = arith.constant 0 : i32
    %c0_i32_1 = arith.constant 0 : i32
    return %c0_i32, %c0_i32_0 : i32, i32
  }
  func.func @transform_3(%arg0: i32) -> (i32, i32) {
    %c0_i32 = arith.constant 0 : i32
    %c0_i32_0 = arith.constant 0 : i32
    %c0_i32_1 = arith.constant 0 : i32
    return %c0_i32, %c0_i32_0 : i32, i32
  }
  func.func @transform_4(%arg0: i32) -> (i32, i32) {
    %c0_i32 = arith.constant 0 : i32
    %c0_i32_0 = arith.constant 0 : i32
    %c0_i32_1 = arith.constant 0 : i32
    return %c0_i32, %c0_i32_0 : i32, i32
  }
  func.func @transform_5(%arg0: i32) -> (i32, i32) {
    %c0_i32 = arith.constant 0 : i32
    %c0_i32_0 = arith.constant 0 : i32
    %c0_i32_1 = arith.constant 0 : i32
    return %c0_i32, %c0_i32_0 : i32, i32
  }
  func.func @transform_6(%arg0: i32) -> (i32, i32) {
    %c0_i32 = arith.constant 0 : i32
    %c0_i32_0 = arith.constant 0 : i32
    return %arg0, %c0_i32 : i32, i32
  }
}

module attributes {stable_mosaic.version = 11 : i64} {
  func.func @kernel(%arg0: i32, %arg1: memref<256x64xf32, #tpu.memory_space<vmem>>, %arg2: memref<256x64xf32, #tpu.memory_space<vmem>>, %arg3: memref<128x128xbf16, #tpu.memory_space<vmem>>, %arg4: memref<1x128xf32, #tpu.memory_space<vmem>>, %arg5: memref<128x128xbf16, #tpu.memory_space<vmem>>, %arg6: memref<1x128xf32, #tpu.memory_space<vmem>>, %arg7: memref<256x128xf32, #tpu.memory_space<vmem>>) attributes {dimension_semantics = [#tpu.dimension_semantics<parallel>], iteration_bounds = array<i64: 4>, scalar_prefetch = 0 : i64, scratch_operands = 0 : i64, tpu.core_type = #tpu.core_type<tc>, window_params = [{transform_indices = @transform_0, window_bounds = array<i64: 256, 64>}, {transform_indices = @transform_1, window_bounds = array<i64: 256, 64>}, {pipeline_mode = #tpu.pipeline_mode<synchronous>, transform_indices = @transform_2, window_bounds = array<i64: 128, 128>}, {pipeline_mode = #tpu.pipeline_mode<synchronous>, transform_indices = @transform_3, window_bounds = array<i64: 1, 128>}, {pipeline_mode = #tpu.pipeline_mode<synchronous>, transform_indices = @transform_4, window_bounds = array<i64: 128, 128>}, {pipeline_mode = #tpu.pipeline_mode<synchronous>, transform_indices = @transform_5, window_bounds = array<i64: 1, 128>}, {transform_indices = @transform_6, window_bounds = array<i64: 256, 128>}]} {
    %c0 = arith.constant 0 : index
    %c0_0 = arith.constant 0 : index
    %0 = vector.load %arg1[%c0, %c0_0] : memref<256x64xf32, #tpu.memory_space<vmem>>, vector<256x64xf32>
    %1 = arith.truncf %0 : vector<256x64xf32> to vector<256x64xbf16>
    %c0_1 = arith.constant 0 : index
    %c0_2 = arith.constant 0 : index
    %2 = vector.load %arg2[%c0_1, %c0_2] : memref<256x64xf32, #tpu.memory_space<vmem>>, vector<256x64xf32>
    %3 = arith.truncf %2 : vector<256x64xf32> to vector<256x64xbf16>
    %4 = tpu.concatenate %1, %3 in 1 : vector<256x64xbf16>, vector<256x64xbf16> -> vector<256x128xbf16>
    %c0_3 = arith.constant 0 : index
    %c0_4 = arith.constant 0 : index
    %5 = vector.load %arg3[%c0_3, %c0_4] : memref<128x128xbf16, #tpu.memory_space<vmem>>, vector<128x128xbf16>
    %cst = arith.constant dense<0.000000e+00> : vector<256x128xf32>
    %6 = tpu.matmul %4, %5, %cst {dimension_numbers = #tpu.dot_dimension_numbers<[1], [0], [0], [1], [0, 0, 1, 1], [], []>} : vector<256x128xbf16>, vector<128x128xbf16>, vector<256x128xf32> -> vector<256x128xf32>
    %c0_5 = arith.constant 0 : index
    %c0_6 = arith.constant 0 : index
    %7 = vector.load %arg4[%c0_5, %c0_6] : memref<1x128xf32, #tpu.memory_space<vmem>>, vector<1x128xf32>
    %8 = vector.broadcast %7 : vector<1x128xf32> to vector<256x128xf32>
    %9 = arith.addf %6, %8 : vector<256x128xf32>
    %cst_7 = arith.constant 0.000000e+00 : f32
    %10 = vector.broadcast %cst_7 : f32 to vector<256x128xf32>
    %11 = arith.maximumf %9, %10 : vector<256x128xf32>
    %12 = arith.truncf %11 : vector<256x128xf32> to vector<256x128xbf16>
    %c0_8 = arith.constant 0 : index
    %c0_9 = arith.constant 0 : index
    %13 = vector.load %arg5[%c0_8, %c0_9] : memref<128x128xbf16, #tpu.memory_space<vmem>>, vector<128x128xbf16>
    %cst_10 = arith.constant dense<0.000000e+00> : vector<256x128xf32>
    %14 = tpu.matmul %12, %13, %cst_10 {dimension_numbers = #tpu.dot_dimension_numbers<[1], [0], [0], [1], [0, 0, 1, 1], [], []>} : vector<256x128xbf16>, vector<128x128xbf16>, vector<256x128xf32> -> vector<256x128xf32>
    %c0_11 = arith.constant 0 : index
    %c0_12 = arith.constant 0 : index
    %15 = vector.load %arg6[%c0_11, %c0_12] : memref<1x128xf32, #tpu.memory_space<vmem>>, vector<1x128xf32>
    %16 = vector.broadcast %15 : vector<1x128xf32> to vector<256x128xf32>
    %17 = arith.addf %14, %16 : vector<256x128xf32>
    %cst_13 = arith.constant 0.000000e+00 : f32
    %18 = vector.broadcast %cst_13 : f32 to vector<256x128xf32>
    %19 = arith.maximumf %17, %18 : vector<256x128xf32>
    %c0_14 = arith.constant 0 : index
    %c0_15 = arith.constant 0 : index
    %20 = vector.load %arg7[%c0_14, %c0_15] : memref<256x128xf32, #tpu.memory_space<vmem>>, vector<256x128xf32>
    tpu.vector_store %arg7[%c0_14, %c0_15], %19 {strides = array<i32>} : memref<256x128xf32, #tpu.memory_space<vmem>>, vector<256x128xf32>,
    return
  }
  func.func @transform_0(%arg0: i32) -> (i32, i32) {
    %c0_i32 = arith.constant 0 : i32
    %c0_i32_0 = arith.constant 0 : i32
    return %arg0, %c0_i32 : i32, i32
  }
  func.func @transform_1(%arg0: i32) -> (i32, i32) {
    %c0_i32 = arith.constant 0 : i32
    %c0_i32_0 = arith.constant 0 : i32
    return %arg0, %c0_i32 : i32, i32
  }
  func.func @transform_2(%arg0: i32) -> (i32, i32) {
    %c0_i32 = arith.constant 0 : i32
    %c0_i32_0 = arith.constant 0 : i32
    %c0_i32_1 = arith.constant 0 : i32
    return %c0_i32, %c0_i32_0 : i32, i32
  }
  func.func @transform_3(%arg0: i32) -> (i32, i32) {
    %c0_i32 = arith.constant 0 : i32
    %c0_i32_0 = arith.constant 0 : i32
    %c0_i32_1 = arith.constant 0 : i32
    return %c0_i32, %c0_i32_0 : i32, i32
  }
  func.func @transform_4(%arg0: i32) -> (i32, i32) {
    %c0_i32 = arith.constant 0 : i32
    %c0_i32_0 = arith.constant 0 : i32
    %c0_i32_1 = arith.constant 0 : i32
    return %c0_i32, %c0_i32_0 : i32, i32
  }
  func.func @transform_5(%arg0: i32) -> (i32, i32) {
    %c0_i32 = arith.constant 0 : i32
    %c0_i32_0 = arith.constant 0 : i32
    %c0_i32_1 = arith.constant 0 : i32
    return %c0_i32, %c0_i32_0 : i32, i32
  }
  func.func @transform_6(%arg0: i32) -> (i32, i32) {
    %c0_i32 = arith.constant 0 : i32
    %c0_i32_0 = arith.constant 0 : i32
    return %arg0, %c0_i32 : i32, i32
  }
}

</mosaic_0001>

<llo_original>
// kernel: tpu_custom_call.1
$region0: #{tpu_custom_call.1}
  #allocation0 [shape = 'u32[]', space=smem, size = 0x4, offset = 0x4, fixed_abs, tag = 'smem constant byte address 0x4 - core index']
  #allocation1 [shape = 'u32[144,128]{1,0:T(1,128)}', space=vmem, size = 0x12000, scoped, tag = 'internal scratch']
  %s0 = inlined_call_operand.vmem [shape: f32[1024,64], index: 0, kind: input, shape index: {}]
  %s1 = inlined_call_operand.vmem [shape: f32[1024,64], index: 1, kind: input, shape index: {}]
  %s2 = inlined_call_operand.vmem [shape: bf16[128,128], index: 2, kind: input, shape index: {}]
  %s3 = inlined_call_operand.vmem [shape: f32[1,128], index: 3, kind: input, shape index: {}]
  %s4 = inlined_call_operand.vmem [shape: bf16[128,128], index: 4, kind: input, shape index: {}]
  %s5 = inlined_call_operand.vmem [shape: f32[1,128], index: 5, kind: input, shape index: {}]
  %s6 = inlined_call_operand.hbm [shape: f32[1024,128], index: 6, kind: output, shape index: {}]
  %s7 = sld [smem:[#allocation0]]
  $region57: #{tpu_custom_call.1} parent=0
    _
  %s9 = ssub.s32 1, %s7
  %s10 = scalar_select 0, %s9, %s7
  $region1: #{tpu_custom_call.1} parent=0
    #allocation2 [shape = 'u8[262144]{0}', space=vmem, size = 0x40000, scoped, tag = 'output window, operand 0']
    #allocation3 [shape = 's32[2]{0}', space=sflag, size = 0x8, scoped, tag = 'scoped memory for tpu_custom_call.1']
    %11 = vsyncpa [#allocation3], 0
    %s12 = scalar_lea.sflag [#allocation3], 1
    %13 = vsyncpa %s12, 0
    loop: start=0, step=1, limit=6
    $region2: #{tpu_custom_call.1} parent=1 // loop_pre_header
      _
    $region3: #{tpu_custom_call.1} parent=1 // loop_header
      %s15 = sphi 0, %s19
      %p16 = scmp.ge.s32.totalorder %s15, 6
      %s25 = sphi 0, %s27
      %s28 = sphi 0, %s25
      %s29 = sphi 0, %s28
      %s45 = sphi 0, %s29
      %s51 = sphi 0, %s53
      %s54 = sphi 0, %s51
      %s55 = sphi 0, %s54
      %s71 = sphi 0, %s55
      %s75 = sphi 0, %s75
      %s77 = sphi 0, %s75
      %s78 = sphi 0, %s77
      %s92 = sphi 0, %s78
      %s96 = sphi 0, %s96
      %s98 = sphi 0, %s96
      %s99 = sphi 0, %s98
      %s113 = sphi 0, %s99
      %s117 = sphi 0, %s117
      %s119 = sphi 0, %s117
      %s120 = sphi 0, %s119
      %s134 = sphi 0, %s120
      %s138 = sphi 0, %s138
      %s140 = sphi 0, %s138
      %s141 = sphi 0, %s140
      %s155 = sphi 0, %s141
      %s161 = sphi 0, %s163
      %s164 = sphi 0, %s161
      %s165 = sphi 0, %s164
      %s181 = sphi 0, %s165
    $region4: #{tpu_custom_call.1} parent=1 // loop_header_branch
      %18 = sbr.rel (%p16) target = $region8
    $region5: #{tpu_custom_call.1} parent=1 // loop_body
      %s20 = ssub.s32 %s15, 1
      %s21 = ssub.s32 %s15, 2
      %s22 = sadd.s32 %s15, 1
      %s23 = ssub.s32 %s15, %s22
      %p24 = scmp.eq.s32.totalorder %s23, 0
      %s26 = sadd.s32 %s25, 1
      %s27 = scalar_select %p24, %s25, %s26
      %p30 = pneg %p24
      %p31 = scmp.eq.s32.totalorder %s15, 3
      %p32 = por %p30, %p31
      %p33 = scmp.ne.s32.totalorder %s25, %s28
      %p34 = scmp.eq.s32.totalorder %s15, 0
      %p35 = por %p33, %p34
      %p36 = scmp.ne.s32.totalorder %s25, %s28
      %p37 = scmp.eq.s32.totalorder %s20, 3
      %p38 = por %p36, %p37
      %p39 = scmp.ne.s32.totalorder %s28, %s29
      %p40 = scmp.eq.s32.totalorder %s20, 0
      %p41 = por %p39, %p40
      %p42 = scmp.ne.s32.totalorder %s28, %s29
      %p43 = scmp.eq.s32.totalorder %s21, 3
      %p44 = por %p42, %p43
      %p46 = scmp.ne.s32.totalorder %s29, %s45
      %p47 = scmp.eq.s32.totalorder %s21, 0
      %p48 = por %p46, %p47
      %s49 = ssub.s32 %s15, %s22
      %p50 = scmp.eq.s32.totalorder %s49, 0
      %s52 = sadd.s32 %s51, 1
      %s53 = scalar_select %p50, %s51, %s52
      %p56 = pneg %p50
      %p57 = scmp.eq.s32.totalorder %s15, 3
      %p58 = por %p56, %p57
      %p59 = scmp.ne.s32.totalorder %s51, %s54
      %p60 = scmp.eq.s32.totalorder %s15, 0
      %p61 = por %p59, %p60
      %p62 = scmp.ne.s32.totalorder %s51, %s54
      %p63 = scmp.eq.s32.totalorder %s20, 3
      %p64 = por %p62, %p63
      %p65 = scmp.ne.s32.totalorder %s54, %s55
      %p66 = scmp.eq.s32.totalorder %s20, 0
      %p67 = por %p65, %p66
      %p68 = scmp.ne.s32.totalorder %s54, %s55
      %p69 = scmp.eq.s32.totalorder %s21, 3
      %p70 = por %p68, %p69
      %p72 = scmp.ne.s32.totalorder %s55, %s71
      %p73 = scmp.eq.s32.totalorder %s21, 0
      %p74 = por %p72, %p73
      %s76 = sadd.s32 %s75, 1
      %p79 = scmp.eq.s32.totalorder %s15, 3
      %p80 = scmp.ne.s32.totalorder %s75, %s77
      %p81 = scmp.eq.s32.totalorder %s15, 0
      %p82 = por %p80, %p81
      %p83 = scmp.ne.s32.totalorder %s75, %s77
      %p84 = scmp.eq.s32.totalorder %s20, 3
      %p85 = por %p83, %p84
      %p86 = scmp.ne.s32.totalorder %s77, %s78
      %p87 = scmp.eq.s32.totalorder %s20, 0
      %p88 = por %p86, %p87
      %p89 = scmp.ne.s32.totalorder %s77, %s78
      %p90 = scmp.eq.s32.totalorder %s21, 3
      %p91 = por %p89, %p90
      %p93 = scmp.ne.s32.totalorder %s78, %s92
      %p94 = scmp.eq.s32.totalorder %s21, 0
      %p95 = por %p93, %p94
      %s97 = sadd.s32 %s96, 1
      %p100 = scmp.eq.s32.totalorder %s15, 3
      %p101 = scmp.ne.s32.totalorder %s96, %s98
      %p102 = scmp.eq.s32.totalorder %s15, 0
      %p103 = por %p101, %p102
      %p104 = scmp.ne.s32.totalorder %s96, %s98
      %p105 = scmp.eq.s32.totalorder %s20, 3
      %p106 = por %p104, %p105
      %p107 = scmp.ne.s32.totalorder %s98, %s99
      %p108 = scmp.eq.s32.totalorder %s20, 0
      %p109 = por %p107, %p108
      %p110 = scmp.ne.s32.totalorder %s98, %s99
      %p111 = scmp.eq.s32.totalorder %s21, 3
      %p112 = por %p110, %p111
      %p114 = scmp.ne.s32.totalorder %s99, %s113
      %p115 = scmp.eq.s32.totalorder %s21, 0
      %p116 = por %p114, %p115
      %s118 = sadd.s32 %s117, 1
      %p121 = scmp.eq.s32.totalorder %s15, 3
      %p122 = scmp.ne.s32.totalorder %s117, %s119
      %p123 = scmp.eq.s32.totalorder %s15, 0
      %p124 = por %p122, %p123
      %p125 = scmp.ne.s32.totalorder %s117, %s119
      %p126 = scmp.eq.s32.totalorder %s20, 3
      %p127 = por %p125, %p126
      %p128 = scmp.ne.s32.totalorder %s119, %s120
      %p129 = scmp.eq.s32.totalorder %s20, 0
      %p130 = por %p128, %p129
      %p131 = scmp.ne.s32.totalorder %s119, %s120
      %p132 = scmp.eq.s32.totalorder %s21, 3
      %p133 = por %p131, %p132
      %p135 = scmp.ne.s32.totalorder %s120, %s134
      %p136 = scmp.eq.s32.totalorder %s21, 0
      %p137 = por %p135, %p136
      %s139 = sadd.s32 %s138, 1
      %p142 = scmp.eq.s32.totalorder %s15, 3
      %p143 = scmp.ne.s32.totalorder %s138, %s140
      %p144 = scmp.eq.s32.totalorder %s15, 0
      %p145 = por %p143, %p144
      %p146 = scmp.ne.s32.totalorder %s138, %s140
      %p147 = scmp.eq.s32.totalorder %s20, 3
      %p148 = por %p146, %p147
      %p149 = scmp.ne.s32.totalorder %s140, %s141
      %p150 = scmp.eq.s32.totalorder %s20, 0
      %p151 = por %p149, %p150
      %p152 = scmp.ne.s32.totalorder %s140, %s141
      %p153 = scmp.eq.s32.totalorder %s21, 3
      %p154 = por %p152, %p153
      %p156 = scmp.ne.s32.totalorder %s141, %s155
      %p157 = scmp.eq.s32.totalorder %s21, 0
      %p158 = por %p156, %p157
      %s159 = ssub.s32 %s15, %s22
      %p160 = scmp.eq.s32.totalorder %s159, 0
      %s162 = sadd.s32 %s161, 1
      %s163 = scalar_select %p160, %s161, %s162
      %p166 = pneg %p160
      %p167 = scmp.eq.s32.totalorder %s15, 3
      %p168 = por %p166, %p167
      %p169 = scmp.ne.s32.totalorder %s161, %s164
      %p170 = scmp.eq.s32.totalorder %s15, 0
      %p171 = por %p169, %p170
      %p172 = scmp.ne.s32.totalorder %s161, %s164
      %p173 = scmp.eq.s32.totalorder %s20, 3
      %p174 = por %p172, %p173
      %p175 = scmp.ne.s32.totalorder %s164, %s165
      %p176 = scmp.eq.s32.totalorder %s20, 0
      %p177 = por %p175, %p176
      %p178 = scmp.ne.s32.totalorder %s164, %s165
      %p179 = scmp.eq.s32.totalorder %s21, 3
      %p180 = por %p178, %p179
      %p182 = scmp.ne.s32.totalorder %s165, %s181
      %p183 = scmp.eq.s32.totalorder %s21, 0
      %p184 = por %p182, %p183
      %p185 = scmp.le.s32.totalorder 1, %s15
      %p186 = scmp.lt.s32.totalorder %s15, 5
      %p187 = pnand %p185, %p186
      %p188 = pneg %p187
      // Predicated region
      $region9: #{tpu_custom_call.1} parent=5 // pred_check
        _
      $region10: #{tpu_custom_call.1} parent=5 // pred_check_branch
        %190 = sbr.rel (%p187) target = $region12
      $region11: #{tpu_custom_call.1} parent=5 // pred_region
        %s191 = ssub.s32 %s15, 1
        // Predicated region
        $region13: #{tpu_custom_call.1} parent=11 // pred_check
          %p192 = pneg %p88
        $region14: #{tpu_custom_call.1} parent=11 // pred_check_branch
          %194 = sbr.rel (%p192) target = $region16
        $region15: #{tpu_custom_call.1} parent=11 // pred_region
          _
        $region16: #{tpu_custom_call.1} parent=11 // pred_fallthru
          _
        // Predicated region
        $region17: #{tpu_custom_call.1} parent=11 // pred_check
          %p195 = pneg %p109
        $region18: #{tpu_custom_call.1} parent=11 // pred_check_branch
          %197 = sbr.rel (%p195) target = $region20
        $region19: #{tpu_custom_call.1} parent=11 // pred_region
          _
        $region20: #{tpu_custom_call.1} parent=11 // pred_fallthru
          _
        // Predicated region
        $region21: #{tpu_custom_call.1} parent=11 // pred_check
          %p198 = pneg %p130
        $region22: #{tpu_custom_call.1} parent=11 // pred_check_branch
          %200 = sbr.rel (%p198) target = $region24
        $region23: #{tpu_custom_call.1} parent=11 // pred_region
          _
        $region24: #{tpu_custom_call.1} parent=11 // pred_fallthru
          _
        // Predicated region
        $region25: #{tpu_custom_call.1} parent=11 // pred_check
          %p201 = pneg %p151
        $region26: #{tpu_custom_call.1} parent=11 // pred_check_branch
          %203 = sbr.rel (%p201) target = $region28
        $region27: #{tpu_custom_call.1} parent=11 // pred_region
          _
        $region28: #{tpu_custom_call.1} parent=11 // pred_fallthru
          _
      $region12: #{tpu_custom_call.1} parent=5 // pred_fallthru
        _
      %p204 = scmp.lt.s32.totalorder %s15, 4
      // Predicated region
      $region29: #{tpu_custom_call.1} parent=5 // pred_check
        %p205 = pneg %p204
      $region30: #{tpu_custom_call.1} parent=5 // pred_check_branch
        %207 = sbr.rel (%p205) target = $region32
      $region31: #{tpu_custom_call.1} parent=5 // pred_region
        // Predicated region
        $region33: #{tpu_custom_call.1} parent=31 // pred_check
          %p208 = pneg %p35
        $region34: #{tpu_custom_call.1} parent=31 // pred_check_branch
          %210 = sbr.rel (%p208) target = $region36
        $region35: #{tpu_custom_call.1} parent=31 // pred_region
          %s211 = smul.u32 32, %s15
          %p212 = scmp.lt.s32.totalorder %s211, 127
          %s213 = scalar_select %p212, %s211, 127
          %s214 = smul.addr %s213, 8
          %s215 = scalar_lea.vmem %s0, %s214
          %s216 = smul.u32 32, %s15
        $region36: #{tpu_custom_call.1} parent=31 // pred_fallthru
          _
        // Predicated region
        $region37: #{tpu_custom_call.1} parent=31 // pred_check
          %p217 = pneg %p61
        $region38: #{tpu_custom_call.1} parent=31 // pred_check_branch
          %219 = sbr.rel (%p217) target = $region40
        $region39: #{tpu_custom_call.1} parent=31 // pred_region
          %s220 = smul.u32 32, %s15
          %p221 = scmp.lt.s32.totalorder %s220, 127
          %s222 = scalar_select %p221, %s220, 127
          %s223 = smul.addr %s222, 8
          %s224 = scalar_lea.vmem %s1, %s223
          %s225 = smul.u32 32, %s15
        $region40: #{tpu_custom_call.1} parent=31 // pred_fallthru
          _
      $region32: #{tpu_custom_call.1} parent=5 // pred_fallthru
        _
      %p226 = scmp.le.s32.totalorder 1, %s15
      %p227 = scmp.lt.s32.totalorder %s15, 5
      %p228 = pnand %p226, %p227
      %p229 = pneg %p228
      // Predicated region
      $region41: #{tpu_custom_call.1} parent=5 // pred_check
        _
      $region42: #{tpu_custom_call.1} parent=5 // pred_check_branch
        %231 = sbr.rel (%p228) target = $region44
      $region43: #{tpu_custom_call.1} parent=5 // pred_region
        %s232 = ssub.s32 %s15, 1
        %s233 = smul.u32 32, %s20
        %p234 = scmp.lt.s32.totalorder %s233, 127
        %s235 = scalar_select %p234, %s233, 127
        %s236 = smul.addr %s235, 8
        %s237 = scalar_lea.vmem %s0, %s236
        %p238 = pneg %p41
        %p239 = pneg %p38
        %s240 = smul.u32 32, %s20
        %p241 = scmp.lt.s32.totalorder %s240, 127
        %s242 = scalar_select %p241, %s240, 127
        %s243 = smul.addr %s242, 8
        %s244 = scalar_lea.vmem %s1, %s243
        %p245 = pneg %p67
        %p246 = pneg %p64
        %p247 = pneg %p88
        %p248 = pneg %p85
        %p249 = pneg %p109
        %p250 = pneg %p106
        %p251 = pneg %p130
        %p252 = pneg %p127
        %p253 = pneg %p151
        %p254 = pneg %p148
        %p255 = pneg %p177
        %p256 = pneg %p174
        %s257 = sand.u32 %s164, 1
        %s258 = scalar_lea.sflag [#allocation3], %s257
        %s259 = sand.u32 %s164, 1
        %s260 = smul.addr %s259, 256
        %s261 = scalar_lea.vmem [#allocation2], %s260
        %s262 = smul.u32 32, %s20
        %p263 = scmp.lt.s32.totalorder %s262, 127
        %s264 = scalar_select %p263, %s262, 127
        %s265 = smul.addr %s264, 8
        %s266 = scalar_lea.vmem %s0, %s265
        %s267 = smul.u32 32, %s20
        %s268 = smul.u32 32, %s20
        %p269 = scmp.lt.s32.totalorder %s268, 127
        %s270 = scalar_select %p269, %s268, 127
        %s271 = smul.addr %s270, 8
        %s272 = scalar_lea.vmem %s1, %s271
        %s273 = smul.u32 32, %s20
        %s274 = smul.u32 32, %s20
        %v276 = vld [vmem:[%s266] sm:$0xff]
        %v277 = vld [vmem:[%s266 + $0x8] sm:$0xff]
        %v278 = vld [vmem:[%s266 + $0x10] sm:$0xff]
        %v279 = vld [vmem:[%s266 + $0x18] sm:$0xff]
        %v280 = vld [vmem:[%s266 + $0x20] sm:$0xff]
        %v281 = vld [vmem:[%s266 + $0x28] sm:$0xff]
        %v282 = vld [vmem:[%s266 + $0x30] sm:$0xff]
        %v283 = vld [vmem:[%s266 + $0x38] sm:$0xff]
        %v284 = vld [vmem:[%s266 + $0x40] sm:$0xff]
        %v285 = vld [vmem:[%s266 + $0x48] sm:$0xff]
        %v286 = vld [vmem:[%s266 + $0x50] sm:$0xff]
        %v287 = vld [vmem:[%s266 + $0x58] sm:$0xff]
        %v288 = vld [vmem:[%s266 + $0x60] sm:$0xff]
        %v289 = vld [vmem:[%s266 + $0x68] sm:$0xff]
        %v290 = vld [vmem:[%s266 + $0x70] sm:$0xff]
        %v291 = vld [vmem:[%s266 + $0x78] sm:$0xff]
        %v292 = vld [vmem:[%s266 + $0x80] sm:$0xff]
        %v293 = vld [vmem:[%s266 + $0x88] sm:$0xff]
        %v294 = vld [vmem:[%s266 + $0x90] sm:$0xff]
        %v295 = vld [vmem:[%s266 + $0x98] sm:$0xff]
        %v296 = vld [vmem:[%s266 + $0xa0] sm:$0xff]
        %v297 = vld [vmem:[%s266 + $0xa8] sm:$0xff]
        %v298 = vld [vmem:[%s266 + $0xb0] sm:$0xff]
        %v299 = vld [vmem:[%s266 + $0xb8] sm:$0xff]
        %v300 = vld [vmem:[%s266 + $0xc0] sm:$0xff]
        %v301 = vld [vmem:[%s266 + $0xc8] sm:$0xff]
        %v302 = vld [vmem:[%s266 + $0xd0] sm:$0xff]
        %v303 = vld [vmem:[%s266 + $0xd8] sm:$0xff]
        %v304 = vld [vmem:[%s266 + $0xe0] sm:$0xff]
        %v305 = vld [vmem:[%s266 + $0xe8] sm:$0xff]
        %v306 = vld [vmem:[%s266 + $0xf0] sm:$0xff]
        %v307 = vld [vmem:[%s266 + $0xf8] sm:$0xff]
        %v308 = vpack.c.bf16 %v277, %v276
        %v309 = vpack.c.bf16 %v279, %v278
        %v310 = vpack.c.bf16 %v281, %v280
        %v311 = vpack.c.bf16 %v283, %v282
        %v312 = vpack.c.bf16 %v285, %v284
        %v313 = vpack.c.bf16 %v287, %v286
        %v314 = vpack.c.bf16 %v289, %v288
        %v315 = vpack.c.bf16 %v291, %v290
        %v316 = vpack.c.bf16 %v293, %v292
        %v317 = vpack.c.bf16 %v295, %v294
        %v318 = vpack.c.bf16 %v297, %v296
        %v319 = vpack.c.bf16 %v299, %v298
        %v320 = vpack.c.bf16 %v301, %v300
        %v321 = vpack.c.bf16 %v303, %v302
        %v322 = vpack.c.bf16 %v305, %v304
        %v323 = vpack.c.bf16 %v307, %v306
        %v324 = vld [vmem:[%s272] sm:$0xff]
        %v325 = vld [vmem:[%s272 + $0x8] sm:$0xff]
        %v326 = vld [vmem:[%s272 + $0x10] sm:$0xff]
        %v327 = vld [vmem:[%s272 + $0x18] sm:$0xff]
        %v328 = vld [vmem:[%s272 + $0x20] sm:$0xff]
        %v329 = vld [vmem:[%s272 + $0x28] sm:$0xff]
        %v330 = vld [vmem:[%s272 + $0x30] sm:$0xff]
        %v331 = vld [vmem:[%s272 + $0x38] sm:$0xff]
        %v332 = vld [vmem:[%s272 + $0x40] sm:$0xff]
        %v333 = vld [vmem:[%s272 + $0x48] sm:$0xff]
        %v334 = vld [vmem:[%s272 + $0x50] sm:$0xff]
        %v335 = vld [vmem:[%s272 + $0x58] sm:$0xff]
        %v336 = vld [vmem:[%s272 + $0x60] sm:$0xff]
        %v337 = vld [vmem:[%s272 + $0x68] sm:$0xff]
        %v338 = vld [vmem:[%s272 + $0x70] sm:$0xff]
        %v339 = vld [vmem:[%s272 + $0x78] sm:$0xff]
        %v340 = vld [vmem:[%s272 + $0x80] sm:$0xff]
        %v341 = vld [vmem:[%s272 + $0x88] sm:$0xff]
        %v342 = vld [vmem:[%s272 + $0x90] sm:$0xff]
        %v343 = vld [vmem:[%s272 + $0x98] sm:$0xff]
        %v344 = vld [vmem:[%s272 + $0xa0] sm:$0xff]
        %v345 = vld [vmem:[%s272 + $0xa8] sm:$0xff]
        %v346 = vld [vmem:[%s272 + $0xb0] sm:$0xff]
        %v347 = vld [vmem:[%s272 + $0xb8] sm:$0xff]
        %v348 = vld [vmem:[%s272 + $0xc0] sm:$0xff]
        %v349 = vld [vmem:[%s272 + $0xc8] sm:$0xff]
        %v350 = vld [vmem:[%s272 + $0xd0] sm:$0xff]
        %v351 = vld [vmem:[%s272 + $0xd8] sm:$0xff]
        %v352 = vld [vmem:[%s272 + $0xe0] sm:$0xff]
        %v353 = vld [vmem:[%s272 + $0xe8] sm:$0xff]
        %v354 = vld [vmem:[%s272 + $0xf0] sm:$0xff]
        %v355 = vld [vmem:[%s272 + $0xf8] sm:$0xff]
        %v356 = vpack.c.bf16 %v325, %v324
        %v357 = vpack.c.bf16 %v327, %v326
        %v358 = vpack.c.bf16 %v329, %v328
        %v359 = vpack.c.bf16 %v331, %v330
        %v360 = vpack.c.bf16 %v333, %v332
        %v361 = vpack.c.bf16 %v335, %v334
        %v362 = vpack.c.bf16 %v337, %v336
        %v363 = vpack.c.bf16 %v339, %v338
        %v364 = vpack.c.bf16 %v341, %v340
        %v365 = vpack.c.bf16 %v343, %v342
        %v366 = vpack.c.bf16 %v345, %v344
        %v367 = vpack.c.bf16 %v347, %v346
        %v368 = vpack.c.bf16 %v349, %v348
        %v369 = vpack.c.bf16 %v351, %v350
        %v370 = vpack.c.bf16 %v353, %v352
        %v371 = vpack.c.bf16 %v355, %v354
        %388 = vrot.lane.b32.xlu0 %v356, 64
        %v389 = vpop.permute.xlu0 %388
        %390 = vrot.lane.b32.xlu0 %v357, 64
        %v391 = vpop.permute.xlu0 %390
        %392 = vrot.lane.b32.xlu0 %v358, 64
        %v393 = vpop.permute.xlu0 %392
        %394 = vrot.lane.b32.xlu0 %v359, 64
        %v395 = vpop.permute.xlu0 %394
        %396 = vrot.lane.b32.xlu0 %v360, 64
        %v397 = vpop.permute.xlu0 %396
        %398 = vrot.lane.b32.xlu0 %v361, 64
        %v399 = vpop.permute.xlu0 %398
        %400 = vrot.lane.b32.xlu0 %v362, 64
        %v401 = vpop.permute.xlu0 %400
        %402 = vrot.lane.b32.xlu0 %v363, 64
        %v403 = vpop.permute.xlu0 %402
        %404 = vrot.lane.b32.xlu0 %v364, 64
        %v405 = vpop.permute.xlu0 %404
        %406 = vrot.lane.b32.xlu0 %v365, 64
        %v407 = vpop.permute.xlu0 %406
        %408 = vrot.lane.b32.xlu0 %v366, 64
        %v409 = vpop.permute.xlu0 %408
        %410 = vrot.lane.b32.xlu0 %v367, 64
        %v411 = vpop.permute.xlu0 %410
        %412 = vrot.lane.b32.xlu0 %v368, 64
        %v413 = vpop.permute.xlu0 %412
        %414 = vrot.lane.b32.xlu0 %v369, 64
        %v415 = vpop.permute.xlu0 %414
        %416 = vrot.lane.b32.xlu0 %v370, 64
        %v417 = vpop.permute.xlu0 %416
        %418 = vrot.lane.b32.xlu0 %v371, 64
        %v419 = vpop.permute.xlu0 %418
        %vm420 = vcmask 523264
        %v423 = vsel %vm420, %v308, %v389
        %v427 = vsel %vm420, %v309, %v391
        %v431 = vsel %vm420, %v310, %v393
        %v435 = vsel %vm420, %v311, %v395
        %v439 = vsel %vm420, %v312, %v397
        %v443 = vsel %vm420, %v313, %v399
        %v447 = vsel %vm420, %v314, %v401
        %v451 = vsel %vm420, %v315, %v403
        %v455 = vsel %vm420, %v316, %v405
        %v459 = vsel %vm420, %v317, %v407
        %v463 = vsel %vm420, %v318, %v409
        %v467 = vsel %vm420, %v319, %v411
        %v471 = vsel %vm420, %v320, %v413
        %v475 = vsel %vm420, %v321, %v415
        %v479 = vsel %vm420, %v322, %v417
        %v483 = vsel %vm420, %v323, %v419
        %v485 = vld [vmem:[%s2] sm:$0xf]
        %v486 = vld [vmem:[%s2 + $0x4] sm:$0xf]
        %v487 = vld [vmem:[%s2 + $0x8] sm:$0xf]
        %v488 = vld [vmem:[%s2 + $0xc] sm:$0xf]
        %v489 = vld [vmem:[%s2 + $0x10] sm:$0xf]
        %v490 = vld [vmem:[%s2 + $0x14] sm:$0xf]
        %v491 = vld [vmem:[%s2 + $0x18] sm:$0xf]
        %v492 = vld [vmem:[%s2 + $0x1c] sm:$0xf]
        %v493 = vld [vmem:[%s2 + $0x20] sm:$0xf]
        %v494 = vld [vmem:[%s2 + $0x24] sm:$0xf]
        %v495 = vld [vmem:[%s2 + $0x28] sm:$0xf]
        %v496 = vld [vmem:[%s2 + $0x2c] sm:$0xf]
        %v497 = vld [vmem:[%s2 + $0x30] sm:$0xf]
        %v498 = vld [vmem:[%s2 + $0x34] sm:$0xf]
        %v499 = vld [vmem:[%s2 + $0x38] sm:$0xf]
        %v500 = vld [vmem:[%s2 + $0x3c] sm:$0xf]
        %v501 = vld [vmem:[%s3] sm:$0x1]
        %v503 = vlaneseq
        %v504 = vshrl.u32 %v503, 7
        %v505 = vsub.s32 0, %v504
        %v506 = vrot.slane %v501, %v505
        %v524 = vunpack.c.l.b16 %v485
        %v525 = vunpack.c.l.b16 %v486
        %v526 = vunpack.c.l.b16 %v487
        %v527 = vunpack.c.l.b16 %v488
        %v528 = vunpack.c.l.b16 %v489
        %v529 = vunpack.c.l.b16 %v490
        %v530 = vunpack.c.l.b16 %v491
        %v531 = vunpack.c.l.b16 %v492
        %v532 = vunpack.c.l.b16 %v493
        %v533 = vunpack.c.l.b16 %v494
        %v534 = vunpack.c.l.b16 %v495
        %v535 = vunpack.c.l.b16 %v496
        %v536 = vunpack.c.l.b16 %v497
        %v537 = vunpack.c.l.b16 %v498
        %v538 = vunpack.c.l.b16 %v499
        %v539 = vunpack.c.l.b16 %v500
        %v540 = vpack.c.b16 %v525, %v524
        %v541 = vpack.c.b16 %v527, %v526
        %v542 = vpack.c.b16 %v529, %v528
        %v543 = vpack.c.b16 %v531, %v530
        %v544 = vpack.c.b16 %v533, %v532
        %v545 = vpack.c.b16 %v535, %v534
        %v546 = vpack.c.b16 %v537, %v536
        %v547 = vpack.c.b16 %v539, %v538
        %556 = vmatprep.subr.bf16.mxu0 0
        %557 = vmatpush1.bf16.msra.mxu0 %v540
        %558 = vmatprep.subr.bf16.mxu0 0
        %559 = vmatpush1.bf16.msra.mxu0 %v541
        %560 = vmatprep.subr.bf16.mxu0 0
        %561 = vmatpush1.bf16.msra.mxu0 %v542
        %562 = vmatprep.subr.bf16.mxu0 0
        %563 = vmatpush1.bf16.msra.mxu0 %v543
        %564 = vmatprep.subr.bf16.mxu0 0
        %565 = vmatpush1.bf16.msra.mxu0 %v544
        %566 = vmatprep.subr.bf16.mxu0 0
        %567 = vmatpush1.bf16.msra.mxu0 %v545
        %568 = vmatprep.subr.bf16.mxu0 0
        %569 = vmatpush1.bf16.msra.mxu0 %v546
        %570 = vmatprep.subr.bf16.mxu0 0
        %571 = vmatpush1.bf16.msra.mxu0 %v547
        %572 = vmatprep.subr.bf16.mxu0 0
        %573 = vmatpush1.bf16.msra.mxu0 0
        %574 = vmatprep.subr.bf16.mxu0 0
        %575 = vmatpush1.bf16.msra.mxu0 0
        %576 = vmatprep.subr.bf16.mxu0 0
        %577 = vmatpush1.bf16.msra.mxu0 0
        %578 = vmatprep.subr.bf16.mxu0 0
        %579 = vmatpush1.bf16.msra.mxu0 0
        %580 = vmatprep.subr.bf16.mxu0 0
        %581 = vmatpush1.bf16.msra.mxu0 0
        %582 = vmatprep.subr.bf16.mxu0 0
        %583 = vmatpush1.bf16.msra.mxu0 0
        %584 = vmatprep.subr.bf16.mxu0 0
        %585 = vmatpush1.bf16.msra.mxu0 0
        %586 = vmatprep.subr.bf16.mxu0 0
        %587 = vmatpush1.bf16.msra.mxu0 0
        %588 = vmatprep.mubr.bf16.mxu0 0
        %589 = vmatmul.mubr.bf16.gmra.mrb[0].mxu0 %v423
        %v590 = vpop.f32.mrb[0].mxu0
        %v591 = vadd.f32 %v506, %v590
        %v592 = vpop.f32.mrb[0].mxu0
        %v593 = vpop.f32.mrb[0].mxu0
        %v594 = vadd.f32 %v506, %v593
        %v595 = vpop.f32.mrb[0].mxu0
        %596 = vmatprep.mubr.bf16.mxu0 0
        %597 = vmatmul.mubr.bf16.gmra.mrb[0].mxu0 %v427
        %v598 = vpop.f32.mrb[0].mxu0
        %v599 = vadd.f32 %v506, %v598
        %v600 = vpop.f32.mrb[0].mxu0
        %v601 = vpop.f32.mrb[0].mxu0
        %v602 = vadd.f32 %v506, %v601
        %v603 = vpop.f32.mrb[0].mxu0
        %604 = vmatprep.mubr.bf16.mxu0 0
        %605 = vmatmul.mubr.bf16.gmra.mrb[0].mxu0 %v431
        %v606 = vpop.f32.mrb[0].mxu0
        %v607 = vadd.f32 %v506, %v606
        %v608 = vpop.f32.mrb[0].mxu0
        %v609 = vpop.f32.mrb[0].mxu0
        %v610 = vadd.f32 %v506, %v609
        %v611 = vpop.f32.mrb[0].mxu0
        %612 = vmatprep.mubr.bf16.mxu0 0
        %613 = vmatmul.mubr.bf16.gmra.mrb[0].mxu0 %v435
        %v614 = vpop.f32.mrb[0].mxu0
        %v615 = vadd.f32 %v506, %v614
        %v616 = vpop.f32.mrb[0].mxu0
        %v617 = vpop.f32.mrb[0].mxu0
        %v618 = vadd.f32 %v506, %v617
        %v619 = vpop.f32.mrb[0].mxu0
        %620 = vmatprep.mubr.bf16.mxu0 0
        %621 = vmatmul.mubr.bf16.gmra.mrb[0].mxu0 %v439
        %v622 = vpop.f32.mrb[0].mxu0
        %v623 = vadd.f32 %v506, %v622
        %v624 = vpop.f32.mrb[0].mxu0
        %v625 = vpop.f32.mrb[0].mxu0
        %v626 = vadd.f32 %v506, %v625
        %v627 = vpop.f32.mrb[0].mxu0
        %628 = vmatprep.mubr.bf16.mxu0 0
        %629 = vmatmul.mubr.bf16.gmra.mrb[0].mxu0 %v443
        %v630 = vpop.f32.mrb[0].mxu0
        %v631 = vadd.f32 %v506, %v630
        %v632 = vpop.f32.mrb[0].mxu0
        %v633 = vpop.f32.mrb[0].mxu0
        %v634 = vadd.f32 %v506, %v633
        %v635 = vpop.f32.mrb[0].mxu0
        %636 = vmatprep.mubr.bf16.mxu0 0
        %637 = vmatmul.mubr.bf16.gmra.mrb[0].mxu0 %v447
        %v638 = vpop.f32.mrb[0].mxu0
        %v639 = vadd.f32 %v506, %v638
        %v640 = vpop.f32.mrb[0].mxu0
        %v641 = vpop.f32.mrb[0].mxu0
        %v642 = vadd.f32 %v506, %v641
        %v643 = vpop.f32.mrb[0].mxu0
        %644 = vmatprep.mubr.bf16.mxu0 0
        %645 = vmatmul.mubr.bf16.gmra.mrb[0].mxu0 %v451
        %v646 = vpop.f32.mrb[0].mxu0
        %v647 = vadd.f32 %v506, %v646
        %v648 = vpop.f32.mrb[0].mxu0
        %v649 = vpop.f32.mrb[0].mxu0
        %v650 = vadd.f32 %v506, %v649
        %v651 = vpop.f32.mrb[0].mxu0
        %652 = vmatprep.mubr.bf16.mxu0 0
        %653 = vmatmul.mubr.bf16.gmra.mrb[0].mxu0 %v455
        %v654 = vpop.f32.mrb[0].mxu0
        %v655 = vadd.f32 %v506, %v654
        %v656 = vpop.f32.mrb[0].mxu0
        %v657 = vpop.f32.mrb[0].mxu0
        %v658 = vadd.f32 %v506, %v657
        %v659 = vpop.f32.mrb[0].mxu0
        %660 = vmatprep.mubr.bf16.mxu0 0
        %661 = vmatmul.mubr.bf16.gmra.mrb[0].mxu0 %v459
        %v662 = vpop.f32.mrb[0].mxu0
        %v663 = vadd.f32 %v506, %v662
        %v664 = vpop.f32.mrb[0].mxu0
        %v665 = vpop.f32.mrb[0].mxu0
        %v666 = vadd.f32 %v506, %v665
        %v667 = vpop.f32.mrb[0].mxu0
        %668 = vmatprep.mubr.bf16.mxu0 0
        %669 = vmatmul.mubr.bf16.gmra.mrb[0].mxu0 %v463
        %v670 = vpop.f32.mrb[0].mxu0
        %v671 = vadd.f32 %v506, %v670
        %v672 = vpop.f32.mrb[0].mxu0
        %v673 = vpop.f32.mrb[0].mxu0
        %v674 = vadd.f32 %v506, %v673
        %v675 = vpop.f32.mrb[0].mxu0
        %676 = vmatprep.mubr.bf16.mxu0 0
        %677 = vmatmul.mubr.bf16.gmra.mrb[0].mxu0 %v467
        %v678 = vpop.f32.mrb[0].mxu0
        %v679 = vadd.f32 %v506, %v678
        %v680 = vpop.f32.mrb[0].mxu0
        %v681 = vpop.f32.mrb[0].mxu0
        %v682 = vadd.f32 %v506, %v681
        %v683 = vpop.f32.mrb[0].mxu0
        %684 = vmatprep.mubr.bf16.mxu0 0
        %685 = vmatmul.mubr.bf16.gmra.mrb[0].mxu0 %v471
        %v686 = vpop.f32.mrb[0].mxu0
        %v687 = vadd.f32 %v506, %v686
        %v688 = vpop.f32.mrb[0].mxu0
        %v689 = vpop.f32.mrb[0].mxu0
        %v690 = vadd.f32 %v506, %v689
        %v691 = vpop.f32.mrb[0].mxu0
        %692 = vmatprep.mubr.bf16.mxu0 0
        %693 = vmatmul.mubr.bf16.gmra.mrb[0].mxu0 %v475
        %v694 = vpop.f32.mrb[0].mxu0
        %v695 = vadd.f32 %v506, %v694
        %v696 = vpop.f32.mrb[0].mxu0
        %v697 = vpop.f32.mrb[0].mxu0
        %v698 = vadd.f32 %v506, %v697
        %v699 = vpop.f32.mrb[0].mxu0
        %700 = vmatprep.mubr.bf16.mxu0 0
        %701 = vmatmul.mubr.bf16.gmra.mrb[0].mxu0 %v479
        %v702 = vpop.f32.mrb[0].mxu0
        %v703 = vadd.f32 %v506, %v702
        %v704 = vpop.f32.mrb[0].mxu0
        %v705 = vpop.f32.mrb[0].mxu0
        %v706 = vadd.f32 %v506, %v705
        %v707 = vpop.f32.mrb[0].mxu0
        %708 = vmatprep.mubr.bf16.mxu0 0
        %709 = vmatmul.mubr.bf16.gmra.mrb[0].mxu0 %v483
        %v710 = vpop.f32.mrb[0].mxu0
        %v711 = vadd.f32 %v506, %v710
        %v712 = vpop.f32.mrb[0].mxu0
        %v713 = vpop.f32.mrb[0].mxu0
        %v714 = vadd.f32 %v506, %v713
        %v715 = vpop.f32.mrb[0].mxu0
        %716 = vdwg.mxu0
        %v717 = vmax.f32 %v591, 0.0
        %v718 = vmax.f32 %v594, 0.0
        %v719 = vmax.f32 %v599, 0.0
        %v720 = vmax.f32 %v602, 0.0
        %v721 = vmax.f32 %v607, 0.0
        %v722 = vmax.f32 %v610, 0.0
        %v723 = vmax.f32 %v615, 0.0
        %v724 = vmax.f32 %v618, 0.0
        %v725 = vmax.f32 %v623, 0.0
        %v726 = vmax.f32 %v626, 0.0
        %v727 = vmax.f32 %v631, 0.0
        %v728 = vmax.f32 %v634, 0.0
        %v729 = vmax.f32 %v639, 0.0
        %v730 = vmax.f32 %v642, 0.0
        %v731 = vmax.f32 %v647, 0.0
        %v732 = vmax.f32 %v650, 0.0
        %v733 = vmax.f32 %v655, 0.0
        %v734 = vmax.f32 %v658, 0.0
        %v735 = vmax.f32 %v663, 0.0
        %v736 = vmax.f32 %v666, 0.0
        %v737 = vmax.f32 %v671, 0.0
        %v738 = vmax.f32 %v674, 0.0
        %v739 = vmax.f32 %v679, 0.0
        %v740 = vmax.f32 %v682, 0.0
        %v741 = vmax.f32 %v687, 0.0
        %v742 = vmax.f32 %v690, 0.0
        %v743 = vmax.f32 %v695, 0.0
        %v744 = vmax.f32 %v698, 0.0
        %v745 = vmax.f32 %v703, 0.0
        %v746 = vmax.f32 %v706, 0.0
        %v747 = vmax.f32 %v711, 0.0
        %v748 = vmax.f32 %v714, 0.0
        %v749 = vpack.c.bf16 %v718, %v717
        %v750 = vpack.c.bf16 %v720, %v719
        %v751 = vpack.c.bf16 %v722, %v721
        %v752 = vpack.c.bf16 %v724, %v723
        %v753 = vpack.c.bf16 %v726, %v725
        %v754 = vpack.c.bf16 %v728, %v727
        %v755 = vpack.c.bf16 %v730, %v729
        %v756 = vpack.c.bf16 %v732, %v731
        %v757 = vpack.c.bf16 %v734, %v733
        %v758 = vpack.c.bf16 %v736, %v735
        %v759 = vpack.c.bf16 %v738, %v737
        %v760 = vpack.c.bf16 %v740, %v739
        %v761 = vpack.c.bf16 %v742, %v741
        %v762 = vpack.c.bf16 %v744, %v743
        %v763 = vpack.c.bf16 %v746, %v745
        %v764 = vpack.c.bf16 %v748, %v747
        %v765 = vld [vmem:[%s4] sm:$0xf]
        %v766 = vld [vmem:[%s4 + $0x4] sm:$0xf]
        %v767 = vld [vmem:[%s4 + $0x8] sm:$0xf]
        %v768 = vld [vmem:[%s4 + $0xc] sm:$0xf]
        %v769 = vld [vmem:[%s4 + $0x10] sm:$0xf]
        %v770 = vld [vmem:[%s4 + $0x14] sm:$0xf]
        %v771 = vld [vmem:[%s4 + $0x18] sm:$0xf]
        %v772 = vld [vmem:[%s4 + $0x1c] sm:$0xf]
        %v773 = vld [vmem:[%s4 + $0x20] sm:$0xf]
        %v774 = vld [vmem:[%s4 + $0x24] sm:$0xf]
        %v775 = vld [vmem:[%s4 + $0x28] sm:$0xf]
        %v776 = vld [vmem:[%s4 + $0x2c] sm:$0xf]
        %v777 = vld [vmem:[%s4 + $0x30] sm:$0xf]
        %v778 = vld [vmem:[%s4 + $0x34] sm:$0xf]
        %v779 = vld [vmem:[%s4 + $0x38] sm:$0xf]
        %v780 = vld [vmem:[%s4 + $0x3c] sm:$0xf]
        %v781 = vld [vmem:[%s5] sm:$0x1]
        %v783 = vlaneseq
        %v784 = vshrl.u32 %v783, 7
        %v785 = vsub.s32 0, %v784
        %v786 = vrot.slane %v781, %v785
        %v804 = vunpack.c.l.b16 %v765
        %v805 = vunpack.c.l.b16 %v766
        %v806 = vunpack.c.l.b16 %v767
        %v807 = vunpack.c.l.b16 %v768
        %v808 = vunpack.c.l.b16 %v769
        %v809 = vunpack.c.l.b16 %v770
        %v810 = vunpack.c.l.b16 %v771
        %v811 = vunpack.c.l.b16 %v772
        %v812 = vunpack.c.l.b16 %v773
        %v813 = vunpack.c.l.b16 %v774
        %v814 = vunpack.c.l.b16 %v775
        %v815 = vunpack.c.l.b16 %v776
        %v816 = vunpack.c.l.b16 %v777
        %v817 = vunpack.c.l.b16 %v778
        %v818 = vunpack.c.l.b16 %v779
        %v819 = vunpack.c.l.b16 %v780
        %v820 = vpack.c.b16 %v805, %v804
        %v821 = vpack.c.b16 %v807, %v806
        %v822 = vpack.c.b16 %v809, %v808
        %v823 = vpack.c.b16 %v811, %v810
        %v824 = vpack.c.b16 %v813, %v812
        %v825 = vpack.c.b16 %v815, %v814
        %v826 = vpack.c.b16 %v817, %v816
        %v827 = vpack.c.b16 %v819, %v818
        %836 = vmatprep.subr.bf16.mxu0 0
        %837 = vmatpush1.bf16.msra.mxu0 %v820
        %838 = vmatprep.subr.bf16.mxu0 0
        %839 = vmatpush1.bf16.msra.mxu0 %v821
        %840 = vmatprep.subr.bf16.mxu0 0
        %841 = vmatpush1.bf16.msra.mxu0 %v822
        %842 = vmatprep.subr.bf16.mxu0 0
        %843 = vmatpush1.bf16.msra.mxu0 %v823
        %844 = vmatprep.subr.bf16.mxu0 0
        %845 = vmatpush1.bf16.msra.mxu0 %v824
        %846 = vmatprep.subr.bf16.mxu0 0
        %847 = vmatpush1.bf16.msra.mxu0 %v825
        %848 = vmatprep.subr.bf16.mxu0 0
        %849 = vmatpush1.bf16.msra.mxu0 %v826
        %850 = vmatprep.subr.bf16.mxu0 0
        %851 = vmatpush1.bf16.msra.mxu0 %v827
        %852 = vmatprep.subr.bf16.mxu0 0
        %853 = vmatpush1.bf16.msra.mxu0 0
        %854 = vmatprep.subr.bf16.mxu0 0
        %855 = vmatpush1.bf16.msra.mxu0 0
        %856 = vmatprep.subr.bf16.mxu0 0
        %857 = vmatpush1.bf16.msra.mxu0 0
        %858 = vmatprep.subr.bf16.mxu0 0
        %859 = vmatpush1.bf16.msra.mxu0 0
        %860 = vmatprep.subr.bf16.mxu0 0
        %861 = vmatpush1.bf16.msra.mxu0 0
        %862 = vmatprep.subr.bf16.mxu0 0
        %863 = vmatpush1.bf16.msra.mxu0 0
        %864 = vmatprep.subr.bf16.mxu0 0
        %865 = vmatpush1.bf16.msra.mxu0 0
        %866 = vmatprep.subr.bf16.mxu0 0
        %867 = vmatpush1.bf16.msra.mxu0 0
        %868 = vmatprep.mubr.bf16.mxu0 0
        %869 = vmatmul.mubr.bf16.gmra.mrb[0].mxu0 %v749
        %v870 = vpop.f32.mrb[0].mxu0
        %v871 = vadd.f32 %v786, %v870
        %v872 = vpop.f32.mrb[0].mxu0
        %v873 = vpop.f32.mrb[0].mxu0
        %v874 = vadd.f32 %v786, %v873
        %v875 = vpop.f32.mrb[0].mxu0
        %876 = vmatprep.mubr.bf16.mxu0 0
        %877 = vmatmul.mubr.bf16.gmra.mrb[0].mxu0 %v750
        %v878 = vpop.f32.mrb[0].mxu0
        %v879 = vadd.f32 %v786, %v878
        %v880 = vpop.f32.mrb[0].mxu0
        %v881 = vpop.f32.mrb[0].mxu0
        %v882 = vadd.f32 %v786, %v881
        %v883 = vpop.f32.mrb[0].mxu0
        %884 = vmatprep.mubr.bf16.mxu0 0
        %885 = vmatmul.mubr.bf16.gmra.mrb[0].mxu0 %v751
        %v886 = vpop.f32.mrb[0].mxu0
        %v887 = vadd.f32 %v786, %v886
        %v888 = vpop.f32.mrb[0].mxu0
        %v889 = vpop.f32.mrb[0].mxu0
        %v890 = vadd.f32 %v786, %v889
        %v891 = vpop.f32.mrb[0].mxu0
        %892 = vmatprep.mubr.bf16.mxu0 0
        %893 = vmatmul.mubr.bf16.gmra.mrb[0].mxu0 %v752
        %v894 = vpop.f32.mrb[0].mxu0
        %v895 = vadd.f32 %v786, %v894
        %v896 = vpop.f32.mrb[0].mxu0
        %v897 = vpop.f32.mrb[0].mxu0
        %v898 = vadd.f32 %v786, %v897
        %v899 = vpop.f32.mrb[0].mxu0
        %900 = vmatprep.mubr.bf16.mxu0 0
        %901 = vmatmul.mubr.bf16.gmra.mrb[0].mxu0 %v753
        %v902 = vpop.f32.mrb[0].mxu0
        %v903 = vadd.f32 %v786, %v902
        %v904 = vpop.f32.mrb[0].mxu0
        %v905 = vpop.f32.mrb[0].mxu0
        %v906 = vadd.f32 %v786, %v905
        %v907 = vpop.f32.mrb[0].mxu0
        %908 = vmatprep.mubr.bf16.mxu0 0
        %909 = vmatmul.mubr.bf16.gmra.mrb[0].mxu0 %v754
        %v910 = vpop.f32.mrb[0].mxu0
        %v911 = vadd.f32 %v786, %v910
        %v912 = vpop.f32.mrb[0].mxu0
        %v913 = vpop.f32.mrb[0].mxu0
        %v914 = vadd.f32 %v786, %v913
        %v915 = vpop.f32.mrb[0].mxu0
        %916 = vmatprep.mubr.bf16.mxu0 0
        %917 = vmatmul.mubr.bf16.gmra.mrb[0].mxu0 %v755
        %v918 = vpop.f32.mrb[0].mxu0
        %v919 = vadd.f32 %v786, %v918
        %v920 = vpop.f32.mrb[0].mxu0
        %v921 = vpop.f32.mrb[0].mxu0
        %v922 = vadd.f32 %v786, %v921
        %v923 = vpop.f32.mrb[0].mxu0
        %924 = vmatprep.mubr.bf16.mxu0 0
        %925 = vmatmul.mubr.bf16.gmra.mrb[0].mxu0 %v756
        %v926 = vpop.f32.mrb[0].mxu0
        %v927 = vadd.f32 %v786, %v926
        %v928 = vpop.f32.mrb[0].mxu0
        %v929 = vpop.f32.mrb[0].mxu0
        %v930 = vadd.f32 %v786, %v929
        %v931 = vpop.f32.mrb[0].mxu0
        %932 = vmatprep.mubr.bf16.mxu0 0
        %933 = vmatmul.mubr.bf16.gmra.mrb[0].mxu0 %v757
        %v934 = vpop.f32.mrb[0].mxu0
        %v935 = vadd.f32 %v786, %v934
        %v936 = vpop.f32.mrb[0].mxu0
        %v937 = vpop.f32.mrb[0].mxu0
        %v938 = vadd.f32 %v786, %v937
        %v939 = vpop.f32.mrb[0].mxu0
        %940 = vmatprep.mubr.bf16.mxu0 0
        %941 = vmatmul.mubr.bf16.gmra.mrb[0].mxu0 %v758
        %v942 = vpop.f32.mrb[0].mxu0
        %v943 = vadd.f32 %v786, %v942
        %v944 = vpop.f32.mrb[0].mxu0
        %v945 = vpop.f32.mrb[0].mxu0
        %v946 = vadd.f32 %v786, %v945
        %v947 = vpop.f32.mrb[0].mxu0
        %948 = vmatprep.mubr.bf16.mxu0 0
        %949 = vmatmul.mubr.bf16.gmra.mrb[0].mxu0 %v759
        %v950 = vpop.f32.mrb[0].mxu0
        %v951 = vadd.f32 %v786, %v950
        %v952 = vpop.f32.mrb[0].mxu0
        %v953 = vpop.f32.mrb[0].mxu0
        %v954 = vadd.f32 %v786, %v953
        %v955 = vpop.f32.mrb[0].mxu0
        %956 = vmatprep.mubr.bf16.mxu0 0
        %957 = vmatmul.mubr.bf16.gmra.mrb[0].mxu0 %v760
        %v958 = vpop.f32.mrb[0].mxu0
        %v959 = vadd.f32 %v786, %v958
        %v960 = vpop.f32.mrb[0].mxu0
        %v961 = vpop.f32.mrb[0].mxu0
        %v962 = vadd.f32 %v786, %v961
        %v963 = vpop.f32.mrb[0].mxu0
        %964 = vmatprep.mubr.bf16.mxu0 0
        %965 = vmatmul.mubr.bf16.gmra.mrb[0].mxu0 %v761
        %v966 = vpop.f32.mrb[0].mxu0
        %v967 = vadd.f32 %v786, %v966
        %v968 = vpop.f32.mrb[0].mxu0
        %v969 = vpop.f32.mrb[0].mxu0
        %v970 = vadd.f32 %v786, %v969
        %v971 = vpop.f32.mrb[0].mxu0
        %972 = vmatprep.mubr.bf16.mxu0 0
        %973 = vmatmul.mubr.bf16.gmra.mrb[0].mxu0 %v762
        %v974 = vpop.f32.mrb[0].mxu0
        %v975 = vadd.f32 %v786, %v974
        %v976 = vpop.f32.mrb[0].mxu0
        %v977 = vpop.f32.mrb[0].mxu0
        %v978 = vadd.f32 %v786, %v977
        %v979 = vpop.f32.mrb[0].mxu0
        %980 = vmatprep.mubr.bf16.mxu0 0
        %981 = vmatmul.mubr.bf16.gmra.mrb[0].mxu0 %v763
        %v982 = vpop.f32.mrb[0].mxu0
        %v983 = vadd.f32 %v786, %v982
        %v984 = vpop.f32.mrb[0].mxu0
        %v985 = vpop.f32.mrb[0].mxu0
        %v986 = vadd.f32 %v786, %v985
        %v987 = vpop.f32.mrb[0].mxu0
        %988 = vmatprep.mubr.bf16.mxu0 0
        %989 = vmatmul.mubr.bf16.gmra.mrb[0].mxu0 %v764
        %v990 = vpop.f32.mrb[0].mxu0
        %v991 = vadd.f32 %v786, %v990
        %v992 = vpop.f32.mrb[0].mxu0
        %v993 = vpop.f32.mrb[0].mxu0
        %v994 = vadd.f32 %v786, %v993
        %v995 = vpop.f32.mrb[0].mxu0
        %996 = vdwg.mxu0
        %v997 = vmax.f32 %v871, 0.0
        %v998 = vmax.f32 %v874, 0.0
        %v999 = vmax.f32 %v879, 0.0
        %v1000 = vmax.f32 %v882, 0.0
        %v1001 = vmax.f32 %v887, 0.0
        %v1002 = vmax.f32 %v890, 0.0
        %v1003 = vmax.f32 %v895, 0.0
        %v1004 = vmax.f32 %v898, 0.0
        %v1005 = vmax.f32 %v903, 0.0
        %v1006 = vmax.f32 %v906, 0.0
        %v1007 = vmax.f32 %v911, 0.0
        %v1008 = vmax.f32 %v914, 0.0
        %v1009 = vmax.f32 %v919, 0.0
        %v1010 = vmax.f32 %v922, 0.0
        %v1011 = vmax.f32 %v927, 0.0
        %v1012 = vmax.f32 %v930, 0.0
        %v1013 = vmax.f32 %v935, 0.0
        %v1014 = vmax.f32 %v938, 0.0
        %v1015 = vmax.f32 %v943, 0.0
        %v1016 = vmax.f32 %v946, 0.0
        %v1017 = vmax.f32 %v951, 0.0
        %v1018 = vmax.f32 %v954, 0.0
        %v1019 = vmax.f32 %v959, 0.0
        %v1020 = vmax.f32 %v962, 0.0
        %v1021 = vmax.f32 %v967, 0.0
        %v1022 = vmax.f32 %v970, 0.0
        %v1023 = vmax.f32 %v975, 0.0
        %v1024 = vmax.f32 %v978, 0.0
        %v1025 = vmax.f32 %v983, 0.0
        %v1026 = vmax.f32 %v986, 0.0
        %v1027 = vmax.f32 %v991, 0.0
        %v1028 = vmax.f32 %v994, 0.0
        %1029 = vst [vmem:[%s261] sm:$0xff] %v997
        %1030 = vst [vmem:[%s261 + $0x8] sm:$0xff] %v998
        %1031 = vst [vmem:[%s261 + $0x10] sm:$0xff] %v999
        %1032 = vst [vmem:[%s261 + $0x18] sm:$0xff] %v1000
        %1033 = vst [vmem:[%s261 + $0x20] sm:$0xff] %v1001
        %1034 = vst [vmem:[%s261 + $0x28] sm:$0xff] %v1002
        %1035 = vst [vmem:[%s261 + $0x30] sm:$0xff] %v1003
        %1036 = vst [vmem:[%s261 + $0x38] sm:$0xff] %v1004
        %1037 = vst [vmem:[%s261 + $0x40] sm:$0xff] %v1005
        %1038 = vst [vmem:[%s261 + $0x48] sm:$0xff] %v1006
        %1039 = vst [vmem:[%s261 + $0x50] sm:$0xff] %v1007
        %1040 = vst [vmem:[%s261 + $0x58] sm:$0xff] %v1008
        %1041 = vst [vmem:[%s261 + $0x60] sm:$0xff] %v1009
        %1042 = vst [vmem:[%s261 + $0x68] sm:$0xff] %v1010
        %1043 = vst [vmem:[%s261 + $0x70] sm:$0xff] %v1011
        %1044 = vst [vmem:[%s261 + $0x78] sm:$0xff] %v1012
        %1045 = vst [vmem:[%s261 + $0x80] sm:$0xff] %v1013
        %1046 = vst [vmem:[%s261 + $0x88] sm:$0xff] %v1014
        %1047 = vst [vmem:[%s261 + $0x90] sm:$0xff] %v1015
        %1048 = vst [vmem:[%s261 + $0x98] sm:$0xff] %v1016
        %1049 = vst [vmem:[%s261 + $0xa0] sm:$0xff] %v1017
        %1050 = vst [vmem:[%s261 + $0xa8] sm:$0xff] %v1018
        %1051 = vst [vmem:[%s261 + $0xb0] sm:$0xff] %v1019
        %1052 = vst [vmem:[%s261 + $0xb8] sm:$0xff] %v1020
        %1053 = vst [vmem:[%s261 + $0xc0] sm:$0xff] %v1021
        %1054 = vst [vmem:[%s261 + $0xc8] sm:$0xff] %v1022
        %1055 = vst [vmem:[%s261 + $0xd0] sm:$0xff] %v1023
        %1056 = vst [vmem:[%s261 + $0xd8] sm:$0xff] %v1024
        %1057 = vst [vmem:[%s261 + $0xe0] sm:$0xff] %v1025
        %1058 = vst [vmem:[%s261 + $0xe8] sm:$0xff] %v1026
        %1059 = vst [vmem:[%s261 + $0xf0] sm:$0xff] %v1027
        %1060 = vst [vmem:[%s261 + $0xf8] sm:$0xff] %v1028
        %s1061 = sand.u32 %s164, 1
        %s1062 = scalar_lea.sflag [#allocation3], %s1061
        %s1063 = sand.u32 %s164, 1
        %s1064 = smul.addr %s1063, 256
        %s1065 = scalar_lea.vmem [#allocation2], %s1064
        // Predicated region
        $region45: #{tpu_custom_call.1} parent=43 // pred_check
          %p1066 = pneg %p174
        $region46: #{tpu_custom_call.1} parent=43 // pred_check_branch
          %1068 = sbr.rel (%p1066) target = $region48
        $region47: #{tpu_custom_call.1} parent=43 // pred_region
          %s1069 = smul.u32 32, %s20
          %s1071 = ssub.s32 4096, 4096
          %1072 = vsyncadd %s1062, %s1071
          %s1073 = smul.addr %s1069, 128
          %s1074 = scalar_lea.hbm %s6, %s1073
          %s1075 = sshll.u32 %s1065, 4
          %s1076 = int_to_ptr.vmem [resolvable:$true] %s1075
          %1081 = dma.vmem_to_hbm [thread:$0]  %s1076, 4096, %s1074, %s1062, 128, 128, 8
        $region48: #{tpu_custom_call.1} parent=43 // pred_fallthru
          _
      $region44: #{tpu_custom_call.1} parent=5 // pred_fallthru
        _
      %p1082 = scmp.le.s32.totalorder 2, %s15
      // Predicated region
      $region49: #{tpu_custom_call.1} parent=5 // pred_check
        %p1083 = pneg %p1082
      $region50: #{tpu_custom_call.1} parent=5 // pred_check_branch
        %1085 = sbr.rel (%p1083) target = $region52
      $region51: #{tpu_custom_call.1} parent=5 // pred_region
        %s1086 = ssub.s32 %s15, 2
        // Predicated region
        $region53: #{tpu_custom_call.1} parent=51 // pred_check
          %p1087 = pneg %p180
        $region54: #{tpu_custom_call.1} parent=51 // pred_check_branch
          %1089 = sbr.rel (%p1087) target = $region56
        $region55: #{tpu_custom_call.1} parent=51 // pred_region
          %s1090 = sand.u32 %s165, 1
          %s1091 = scalar_lea.sflag [#allocation3], %s1090
          %s1092 = sand.u32 %s165, 1
          %s1093 = smul.addr %s1092, 256
          %s1094 = scalar_lea.vmem [#allocation2], %s1093
          %1095 = dma.done %s1091, 4096
        $region56: #{tpu_custom_call.1} parent=51 // pred_fallthru
          _
      $region52: #{tpu_custom_call.1} parent=5 // pred_fallthru
        _
    $region6: #{tpu_custom_call.1} parent=1 // loop_footer
      %s19 = sadd.s32 1, %s15
    $region7: #{tpu_custom_call.1} parent=1 // loop_footer_branch
      %14 = sbr.rel target = $region3
    $region8: #{tpu_custom_call.1} parent=1 // loop_exit
      _
    %1096 = vsyncpa [#allocation3], 1
    %s1097 = scalar_lea.sflag [#allocation3], 1
    %1098 = vsyncpa %s1097, 1

// kernel: tpu_custom_call.1
$region0: #{tpu_custom_call.1}
  #allocation0 [shape = 'u32[]', space=smem, size = 0x4, offset = 0x4, fixed_abs, tag = 'smem constant byte address 0x4 - core index']
  #allocation1 [shape = 'u32[144,128]{1,0:T(1,128)}', space=vmem, size = 0x12000, scoped, tag = 'internal scratch']
  %s0 = inlined_call_operand.vmem [shape: f32[1024,64], index: 0, kind: input, shape index: {}]
  %s1 = inlined_call_operand.vmem [shape: f32[1024,64], index: 1, kind: input, shape index: {}]
  %s2 = inlined_call_operand.vmem [shape: bf16[128,128], index: 2, kind: input, shape index: {}]
  %s3 = inlined_call_operand.vmem [shape: f32[1,128], index: 3, kind: input, shape index: {}]
  %s4 = inlined_call_operand.vmem [shape: bf16[128,128], index: 4, kind: input, shape index: {}]
  %s5 = inlined_call_operand.vmem [shape: f32[1,128], index: 5, kind: input, shape index: {}]
  %s6 = inlined_call_operand.hbm [shape: f32[1024,128], index: 6, kind: output, shape index: {}]
  %s7 = sld [smem:[#allocation0]]
  $region57: #{tpu_custom_call.1} parent=0
    _
  %s9 = ssub.s32 1, %s7
  %s10 = scalar_select 0, %s9, %s7
  $region1: #{tpu_custom_call.1} parent=0
    #allocation2 [shape = 'u8[262144]{0}', space=vmem, size = 0x40000, scoped, tag = 'output window, operand 0']
    #allocation3 [shape = 's32[2]{0}', space=sflag, size = 0x8, scoped, tag = 'scoped memory for tpu_custom_call.1']
    %11 = vsyncpa [#allocation3], 0
    %s12 = scalar_lea.sflag [#allocation3], 1
    %13 = vsyncpa %s12, 0
    loop: start=0, step=1, limit=6
    $region2: #{tpu_custom_call.1} parent=1 // loop_pre_header
      _
    $region3: #{tpu_custom_call.1} parent=1 // loop_header
      %s15 = sphi 0, %s19
      %p16 = scmp.ge.s32.totalorder %s15, 6
      %s25 = sphi 0, %s27
      %s28 = sphi 0, %s25
      %s29 = sphi 0, %s28
      %s45 = sphi 0, %s29
      %s51 = sphi 0, %s53
      %s54 = sphi 0, %s51
      %s55 = sphi 0, %s54
      %s71 = sphi 0, %s55
      %s75 = sphi 0, %s75
      %s77 = sphi 0, %s75
      %s78 = sphi 0, %s77
      %s92 = sphi 0, %s78
      %s96 = sphi 0, %s96
      %s98 = sphi 0, %s96
      %s99 = sphi 0, %s98
      %s113 = sphi 0, %s99
      %s117 = sphi 0, %s117
      %s119 = sphi 0, %s117
      %s120 = sphi 0, %s119
      %s134 = sphi 0, %s120
      %s138 = sphi 0, %s138
      %s140 = sphi 0, %s138
      %s141 = sphi 0, %s140
      %s155 = sphi 0, %s141
      %s161 = sphi 0, %s163
      %s164 = sphi 0, %s161
      %s165 = sphi 0, %s164
      %s181 = sphi 0, %s165
    $region4: #{tpu_custom_call.1} parent=1 // loop_header_branch
      %18 = sbr.rel (%p16) target = $region8
    $region5: #{tpu_custom_call.1} parent=1 // loop_body
      %s20 = ssub.s32 %s15, 1
      %s21 = ssub.s32 %s15, 2
      %s22 = sadd.s32 %s15, 1
      %s23 = ssub.s32 %s15, %s22
      %p24 = scmp.eq.s32.totalorder %s23, 0
      %s26 = sadd.s32 %s25, 1
      %s27 = scalar_select %p24, %s25, %s26
      %p30 = pneg %p24
      %p31 = scmp.eq.s32.totalorder %s15, 3
      %p32 = por %p30, %p31
      %p33 = scmp.ne.s32.totalorder %s25, %s28
      %p34 = scmp.eq.s32.totalorder %s15, 0
      %p35 = por %p33, %p34
      %p36 = scmp.ne.s32.totalorder %s25, %s28
      %p37 = scmp.eq.s32.totalorder %s20, 3
      %p38 = por %p36, %p37
      %p39 = scmp.ne.s32.totalorder %s28, %s29
      %p40 = scmp.eq.s32.totalorder %s20, 0
      %p41 = por %p39, %p40
      %p42 = scmp.ne.s32.totalorder %s28, %s29
      %p43 = scmp.eq.s32.totalorder %s21, 3
      %p44 = por %p42, %p43
      %p46 = scmp.ne.s32.totalorder %s29, %s45
      %p47 = scmp.eq.s32.totalorder %s21, 0
      %p48 = por %p46, %p47
      %s49 = ssub.s32 %s15, %s22
      %p50 = scmp.eq.s32.totalorder %s49, 0
      %s52 = sadd.s32 %s51, 1
      %s53 = scalar_select %p50, %s51, %s52
      %p56 = pneg %p50
      %p57 = scmp.eq.s32.totalorder %s15, 3
      %p58 = por %p56, %p57
      %p59 = scmp.ne.s32.totalorder %s51, %s54
      %p60 = scmp.eq.s32.totalorder %s15, 0
      %p61 = por %p59, %p60
      %p62 = scmp.ne.s32.totalorder %s51, %s54
      %p63 = scmp.eq.s32.totalorder %s20, 3
      %p64 = por %p62, %p63
      %p65 = scmp.ne.s32.totalorder %s54, %s55
      %p66 = scmp.eq.s32.totalorder %s20, 0
      %p67 = por %p65, %p66
      %p68 = scmp.ne.s32.totalorder %s54, %s55
      %p69 = scmp.eq.s32.totalorder %s21, 3
      %p70 = por %p68, %p69
      %p72 = scmp.ne.s32.totalorder %s55, %s71
      %p73 = scmp.eq.s32.totalorder %s21, 0
      %p74 = por %p72, %p73
      %s76 = sadd.s32 %s75, 1
      %p79 = scmp.eq.s32.totalorder %s15, 3
      %p80 = scmp.ne.s32.totalorder %s75, %s77
      %p81 = scmp.eq.s32.totalorder %s15, 0
      %p82 = por %p80, %p81
      %p83 = scmp.ne.s32.totalorder %s75, %s77
      %p84 = scmp.eq.s32.totalorder %s20, 3
      %p85 = por %p83, %p84
      %p86 = scmp.ne.s32.totalorder %s77, %s78
      %p87 = scmp.eq.s32.totalorder %s20, 0
      %p88 = por %p86, %p87
      %p89 = scmp.ne.s32.totalorder %s77, %s78
      %p90 = scmp.eq.s32.totalorder %s21, 3
      %p91 = por %p89, %p90
      %p93 = scmp.ne.s32.totalorder %s78, %s92
      %p94 = scmp.eq.s32.totalorder %s21, 0
      %p95 = por %p93, %p94
      %s97 = sadd.s32 %s96, 1
      %p100 = scmp.eq.s32.totalorder %s15, 3
      %p101 = scmp.ne.s32.totalorder %s96, %s98
      %p102 = scmp.eq.s32.totalorder %s15, 0
      %p103 = por %p101, %p102
      %p104 = scmp.ne.s32.totalorder %s96, %s98
      %p105 = scmp.eq.s32.totalorder %s20, 3
      %p106 = por %p104, %p105
      %p107 = scmp.ne.s32.totalorder %s98, %s99
      %p108 = scmp.eq.s32.totalorder %s20, 0
      %p109 = por %p107, %p108
      %p110 = scmp.ne.s32.totalorder %s98, %s99
      %p111 = scmp.eq.s32.totalorder %s21, 3
      %p112 = por %p110, %p111
      %p114 = scmp.ne.s32.totalorder %s99, %s113
      %p115 = scmp.eq.s32.totalorder %s21, 0
      %p116 = por %p114, %p115
      %s118 = sadd.s32 %s117, 1
      %p121 = scmp.eq.s32.totalorder %s15, 3
      %p122 = scmp.ne.s32.totalorder %s117, %s119
      %p123 = scmp.eq.s32.totalorder %s15, 0
      %p124 = por %p122, %p123
      %p125 = scmp.ne.s32.totalorder %s117, %s119
      %p126 = scmp.eq.s32.totalorder %s20, 3
      %p127 = por %p125, %p126
      %p128 = scmp.ne.s32.totalorder %s119, %s120
      %p129 = scmp.eq.s32.totalorder %s20, 0
      %p130 = por %p128, %p129
      %p131 = scmp.ne.s32.totalorder %s119, %s120
      %p132 = scmp.eq.s32.totalorder %s21, 3
      %p133 = por %p131, %p132
      %p135 = scmp.ne.s32.totalorder %s120, %s134
      %p136 = scmp.eq.s32.totalorder %s21, 0
      %p137 = por %p135, %p136
      %s139 = sadd.s32 %s138, 1
      %p142 = scmp.eq.s32.totalorder %s15, 3
      %p143 = scmp.ne.s32.totalorder %s138, %s140
      %p144 = scmp.eq.s32.totalorder %s15, 0
      %p145 = por %p143, %p144
      %p146 = scmp.ne.s32.totalorder %s138, %s140
      %p147 = scmp.eq.s32.totalorder %s20, 3
      %p148 = por %p146, %p147
      %p149 = scmp.ne.s32.totalorder %s140, %s141
      %p150 = scmp.eq.s32.totalorder %s20, 0
      %p151 = por %p149, %p150
      %p152 = scmp.ne.s32.totalorder %s140, %s141
      %p153 = scmp.eq.s32.totalorder %s21, 3
      %p154 = por %p152, %p153
      %p156 = scmp.ne.s32.totalorder %s141, %s155
      %p157 = scmp.eq.s32.totalorder %s21, 0
      %p158 = por %p156, %p157
      %s159 = ssub.s32 %s15, %s22
      %p160 = scmp.eq.s32.totalorder %s159, 0
      %s162 = sadd.s32 %s161, 1
      %s163 = scalar_select %p160, %s161, %s162
      %p166 = pneg %p160
      %p167 = scmp.eq.s32.totalorder %s15, 3
      %p168 = por %p166, %p167
      %p169 = scmp.ne.s32.totalorder %s161, %s164
      %p170 = scmp.eq.s32.totalorder %s15, 0
      %p171 = por %p169, %p170
      %p172 = scmp.ne.s32.totalorder %s161, %s164
      %p173 = scmp.eq.s32.totalorder %s20, 3
      %p174 = por %p172, %p173
      %p175 = scmp.ne.s32.totalorder %s164, %s165
      %p176 = scmp.eq.s32.totalorder %s20, 0
      %p177 = por %p175, %p176
      %p178 = scmp.ne.s32.totalorder %s164, %s165
      %p179 = scmp.eq.s32.totalorder %s21, 3
      %p180 = por %p178, %p179
      %p182 = scmp.ne.s32.totalorder %s165, %s181
      %p183 = scmp.eq.s32.totalorder %s21, 0
      %p184 = por %p182, %p183
      %p185 = scmp.le.s32.totalorder 1, %s15
      %p186 = scmp.lt.s32.totalorder %s15, 5
      %p187 = pnand %p185, %p186
      %p188 = pneg %p187
      // Predicated region
      $region9: #{tpu_custom_call.1} parent=5 // pred_check
        _
      $region10: #{tpu_custom_call.1} parent=5 // pred_check_branch
        %190 = sbr.rel (%p187) target = $region12
      $region11: #{tpu_custom_call.1} parent=5 // pred_region
        %s191 = ssub.s32 %s15, 1
        // Predicated region
        $region13: #{tpu_custom_call.1} parent=11 // pred_check
          %p192 = pneg %p88
        $region14: #{tpu_custom_call.1} parent=11 // pred_check_branch
          %194 = sbr.rel (%p192) target = $region16
        $region15: #{tpu_custom_call.1} parent=11 // pred_region
          _
        $region16: #{tpu_custom_call.1} parent=11 // pred_fallthru
          _
        // Predicated region
        $region17: #{tpu_custom_call.1} parent=11 // pred_check
          %p195 = pneg %p109
        $region18: #{tpu_custom_call.1} parent=11 // pred_check_branch
          %197 = sbr.rel (%p195) target = $region20
        $region19: #{tpu_custom_call.1} parent=11 // pred_region
          _
        $region20: #{tpu_custom_call.1} parent=11 // pred_fallthru
          _
        // Predicated region
        $region21: #{tpu_custom_call.1} parent=11 // pred_check
          %p198 = pneg %p130
        $region22: #{tpu_custom_call.1} parent=11 // pred_check_branch
          %200 = sbr.rel (%p198) target = $region24
        $region23: #{tpu_custom_call.1} parent=11 // pred_region
          _
        $region24: #{tpu_custom_call.1} parent=11 // pred_fallthru
          _
        // Predicated region
        $region25: #{tpu_custom_call.1} parent=11 // pred_check
          %p201 = pneg %p151
        $region26: #{tpu_custom_call.1} parent=11 // pred_check_branch
          %203 = sbr.rel (%p201) target = $region28
        $region27: #{tpu_custom_call.1} parent=11 // pred_region
          _
        $region28: #{tpu_custom_call.1} parent=11 // pred_fallthru
          _
      $region12: #{tpu_custom_call.1} parent=5 // pred_fallthru
        _
      %p204 = scmp.lt.s32.totalorder %s15, 4
      // Predicated region
      $region29: #{tpu_custom_call.1} parent=5 // pred_check
        %p205 = pneg %p204
      $region30: #{tpu_custom_call.1} parent=5 // pred_check_branch
        %207 = sbr.rel (%p205) target = $region32
      $region31: #{tpu_custom_call.1} parent=5 // pred_region
        // Predicated region
        $region33: #{tpu_custom_call.1} parent=31 // pred_check
          %p208 = pneg %p35
        $region34: #{tpu_custom_call.1} parent=31 // pred_check_branch
          %210 = sbr.rel (%p208) target = $region36
        $region35: #{tpu_custom_call.1} parent=31 // pred_region
          %s211 = smul.u32 32, %s15
          %p212 = scmp.lt.s32.totalorder %s211, 127
          %s213 = scalar_select %p212, %s211, 127
          %s214 = smul.addr %s213, 8
          %s215 = scalar_lea.vmem %s0, %s214
          %s216 = smul.u32 32, %s15
        $region36: #{tpu_custom_call.1} parent=31 // pred_fallthru
          _
        // Predicated region
        $region37: #{tpu_custom_call.1} parent=31 // pred_check
          %p217 = pneg %p61
        $region38: #{tpu_custom_call.1} parent=31 // pred_check_branch
          %219 = sbr.rel (%p217) target = $region40
        $region39: #{tpu_custom_call.1} parent=31 // pred_region
          %s220 = smul.u32 32, %s15
          %p221 = scmp.lt.s32.totalorder %s220, 127
          %s222 = scalar_select %p221, %s220, 127
          %s223 = smul.addr %s222, 8
          %s224 = scalar_lea.vmem %s1, %s223
          %s225 = smul.u32 32, %s15
        $region40: #{tpu_custom_call.1} parent=31 // pred_fallthru
          _
      $region32: #{tpu_custom_call.1} parent=5 // pred_fallthru
        _
      %p226 = scmp.le.s32.totalorder 1, %s15
      %p227 = scmp.lt.s32.totalorder %s15, 5
      %p228 = pnand %p226, %p227
      %p229 = pneg %p228
      // Predicated region
      $region41: #{tpu_custom_call.1} parent=5 // pred_check
        _
      $region42: #{tpu_custom_call.1} parent=5 // pred_check_branch
        %231 = sbr.rel (%p228) target = $region44
      $region43: #{tpu_custom_call.1} parent=5 // pred_region
        %s232 = ssub.s32 %s15, 1
        %s233 = smul.u32 32, %s20
        %p234 = scmp.lt.s32.totalorder %s233, 127
        %s235 = scalar_select %p234, %s233, 127
        %s236 = smul.addr %s235, 8
        %s237 = scalar_lea.vmem %s0, %s236
        %p238 = pneg %p41
        %p239 = pneg %p38
        %s240 = smul.u32 32, %s20
        %p241 = scmp.lt.s32.totalorder %s240, 127
        %s242 = scalar_select %p241, %s240, 127
        %s243 = smul.addr %s242, 8
        %s244 = scalar_lea.vmem %s1, %s243
        %p245 = pneg %p67
        %p246 = pneg %p64
        %p247 = pneg %p88
        %p248 = pneg %p85
        %p249 = pneg %p109
        %p250 = pneg %p106
        %p251 = pneg %p130
        %p252 = pneg %p127
        %p253 = pneg %p151
        %p254 = pneg %p148
        %p255 = pneg %p177
        %p256 = pneg %p174
        %s257 = sand.u32 %s164, 1
        %s258 = scalar_lea.sflag [#allocation3], %s257
        %s259 = sand.u32 %s164, 1
        %s260 = smul.addr %s259, 256
        %s261 = scalar_lea.vmem [#allocation2], %s260
        %s262 = smul.u32 32, %s20
        %p263 = scmp.lt.s32.totalorder %s262, 127
        %s264 = scalar_select %p263, %s262, 127
        %s265 = smul.addr %s264, 8
        %s266 = scalar_lea.vmem %s0, %s265
        %s267 = smul.u32 32, %s20
        %s268 = smul.u32 32, %s20
        %p269 = scmp.lt.s32.totalorder %s268, 127
        %s270 = scalar_select %p269, %s268, 127
        %s271 = smul.addr %s270, 8
        %s272 = scalar_lea.vmem %s1, %s271
        %s273 = smul.u32 32, %s20
        %s274 = smul.u32 32, %s20
        %v276 = vld [vmem:[%s266] sm:$0xff]
        %v277 = vld [vmem:[%s266 + $0x8] sm:$0xff]
        %v278 = vld [vmem:[%s266 + $0x10] sm:$0xff]
        %v279 = vld [vmem:[%s266 + $0x18] sm:$0xff]
        %v280 = vld [vmem:[%s266 + $0x20] sm:$0xff]
        %v281 = vld [vmem:[%s266 + $0x28] sm:$0xff]
        %v282 = vld [vmem:[%s266 + $0x30] sm:$0xff]
        %v283 = vld [vmem:[%s266 + $0x38] sm:$0xff]
        %v284 = vld [vmem:[%s266 + $0x40] sm:$0xff]
        %v285 = vld [vmem:[%s266 + $0x48] sm:$0xff]
        %v286 = vld [vmem:[%s266 + $0x50] sm:$0xff]
        %v287 = vld [vmem:[%s266 + $0x58] sm:$0xff]
        %v288 = vld [vmem:[%s266 + $0x60] sm:$0xff]
        %v289 = vld [vmem:[%s266 + $0x68] sm:$0xff]
        %v290 = vld [vmem:[%s266 + $0x70] sm:$0xff]
        %v291 = vld [vmem:[%s266 + $0x78] sm:$0xff]
        %v292 = vld [vmem:[%s266 + $0x80] sm:$0xff]
        %v293 = vld [vmem:[%s266 + $0x88] sm:$0xff]
        %v294 = vld [vmem:[%s266 + $0x90] sm:$0xff]
        %v295 = vld [vmem:[%s266 + $0x98] sm:$0xff]
        %v296 = vld [vmem:[%s266 + $0xa0] sm:$0xff]
        %v297 = vld [vmem:[%s266 + $0xa8] sm:$0xff]
        %v298 = vld [vmem:[%s266 + $0xb0] sm:$0xff]
        %v299 = vld [vmem:[%s266 + $0xb8] sm:$0xff]
        %v300 = vld [vmem:[%s266 + $0xc0] sm:$0xff]
        %v301 = vld [vmem:[%s266 + $0xc8] sm:$0xff]
        %v302 = vld [vmem:[%s266 + $0xd0] sm:$0xff]
        %v303 = vld [vmem:[%s266 + $0xd8] sm:$0xff]
        %v304 = vld [vmem:[%s266 + $0xe0] sm:$0xff]
        %v305 = vld [vmem:[%s266 + $0xe8] sm:$0xff]
        %v306 = vld [vmem:[%s266 + $0xf0] sm:$0xff]
        %v307 = vld [vmem:[%s266 + $0xf8] sm:$0xff]
        %v308 = vpack.c.bf16 %v277, %v276
        %v309 = vpack.c.bf16 %v279, %v278
        %v310 = vpack.c.bf16 %v281, %v280
        %v311 = vpack.c.bf16 %v283, %v282
        %v312 = vpack.c.bf16 %v285, %v284
        %v313 = vpack.c.bf16 %v287, %v286
        %v314 = vpack.c.bf16 %v289, %v288
        %v315 = vpack.c.bf16 %v291, %v290
        %v316 = vpack.c.bf16 %v293, %v292
        %v317 = vpack.c.bf16 %v295, %v294
        %v318 = vpack.c.bf16 %v297, %v296
        %v319 = vpack.c.bf16 %v299, %v298
        %v320 = vpack.c.bf16 %v301, %v300
        %v321 = vpack.c.bf16 %v303, %v302
        %v322 = vpack.c.bf16 %v305, %v304
        %v323 = vpack.c.bf16 %v307, %v306
        %v324 = vld [vmem:[%s272] sm:$0xff]
        %v325 = vld [vmem:[%s272 + $0x8] sm:$0xff]
        %v326 = vld [vmem:[%s272 + $0x10] sm:$0xff]
        %v327 = vld [vmem:[%s272 + $0x18] sm:$0xff]
        %v328 = vld [vmem:[%s272 + $0x20] sm:$0xff]
        %v329 = vld [vmem:[%s272 + $0x28] sm:$0xff]
        %v330 = vld [vmem:[%s272 + $0x30] sm:$0xff]
        %v331 = vld [vmem:[%s272 + $0x38] sm:$0xff]
        %v332 = vld [vmem:[%s272 + $0x40] sm:$0xff]
        %v333 = vld [vmem:[%s272 + $0x48] sm:$0xff]
        %v334 = vld [vmem:[%s272 + $0x50] sm:$0xff]
        %v335 = vld [vmem:[%s272 + $0x58] sm:$0xff]
        %v336 = vld [vmem:[%s272 + $0x60] sm:$0xff]
        %v337 = vld [vmem:[%s272 + $0x68] sm:$0xff]
        %v338 = vld [vmem:[%s272 + $0x70] sm:$0xff]
        %v339 = vld [vmem:[%s272 + $0x78] sm:$0xff]
        %v340 = vld [vmem:[%s272 + $0x80] sm:$0xff]
        %v341 = vld [vmem:[%s272 + $0x88] sm:$0xff]
        %v342 = vld [vmem:[%s272 + $0x90] sm:$0xff]
        %v343 = vld [vmem:[%s272 + $0x98] sm:$0xff]
        %v344 = vld [vmem:[%s272 + $0xa0] sm:$0xff]
        %v345 = vld [vmem:[%s272 + $0xa8] sm:$0xff]
        %v346 = vld [vmem:[%s272 + $0xb0] sm:$0xff]
        %v347 = vld [vmem:[%s272 + $0xb8] sm:$0xff]
        %v348 = vld [vmem:[%s272 + $0xc0] sm:$0xff]
        %v349 = vld [vmem:[%s272 + $0xc8] sm:$0xff]
        %v350 = vld [vmem:[%s272 + $0xd0] sm:$0xff]
        %v351 = vld [vmem:[%s272 + $0xd8] sm:$0xff]
        %v352 = vld [vmem:[%s272 + $0xe0] sm:$0xff]
        %v353 = vld [vmem:[%s272 + $0xe8] sm:$0xff]
        %v354 = vld [vmem:[%s272 + $0xf0] sm:$0xff]
        %v355 = vld [vmem:[%s272 + $0xf8] sm:$0xff]
        %v356 = vpack.c.bf16 %v325, %v324
        %v357 = vpack.c.bf16 %v327, %v326
        %v358 = vpack.c.bf16 %v329, %v328
        %v359 = vpack.c.bf16 %v331, %v330
        %v360 = vpack.c.bf16 %v333, %v332
        %v361 = vpack.c.bf16 %v335, %v334
        %v362 = vpack.c.bf16 %v337, %v336
        %v363 = vpack.c.bf16 %v339, %v338
        %v364 = vpack.c.bf16 %v341, %v340
        %v365 = vpack.c.bf16 %v343, %v342
        %v366 = vpack.c.bf16 %v345, %v344
        %v367 = vpack.c.bf16 %v347, %v346
        %v368 = vpack.c.bf16 %v349, %v348
        %v369 = vpack.c.bf16 %v351, %v350
        %v370 = vpack.c.bf16 %v353, %v352
        %v371 = vpack.c.bf16 %v355, %v354
        %388 = vrot.lane.b32.xlu0 %v356, 64
        %v389 = vpop.permute.xlu0 %388
        %390 = vrot.lane.b32.xlu0 %v357, 64
        %v391 = vpop.permute.xlu0 %390
        %392 = vrot.lane.b32.xlu0 %v358, 64
        %v393 = vpop.permute.xlu0 %392
        %394 = vrot.lane.b32.xlu0 %v359, 64
        %v395 = vpop.permute.xlu0 %394
        %396 = vrot.lane.b32.xlu0 %v360, 64
        %v397 = vpop.permute.xlu0 %396
        %398 = vrot.lane.b32.xlu0 %v361, 64
        %v399 = vpop.permute.xlu0 %398
        %400 = vrot.lane.b32.xlu0 %v362, 64
        %v401 = vpop.permute.xlu0 %400
        %402 = vrot.lane.b32.xlu0 %v363, 64
        %v403 = vpop.permute.xlu0 %402
        %404 = vrot.lane.b32.xlu0 %v364, 64
        %v405 = vpop.permute.xlu0 %404
        %406 = vrot.lane.b32.xlu0 %v365, 64
        %v407 = vpop.permute.xlu0 %406
        %408 = vrot.lane.b32.xlu0 %v366, 64
        %v409 = vpop.permute.xlu0 %408
        %410 = vrot.lane.b32.xlu0 %v367, 64
        %v411 = vpop.permute.xlu0 %410
        %412 = vrot.lane.b32.xlu0 %v368, 64
        %v413 = vpop.permute.xlu0 %412
        %414 = vrot.lane.b32.xlu0 %v369, 64
        %v415 = vpop.permute.xlu0 %414
        %416 = vrot.lane.b32.xlu0 %v370, 64
        %v417 = vpop.permute.xlu0 %416
        %418 = vrot.lane.b32.xlu0 %v371, 64
        %v419 = vpop.permute.xlu0 %418
        %vm420 = vcmask 523264
        %v423 = vsel %vm420, %v308, %v389
        %v427 = vsel %vm420, %v309, %v391
        %v431 = vsel %vm420, %v310, %v393
        %v435 = vsel %vm420, %v311, %v395
        %v439 = vsel %vm420, %v312, %v397
        %v443 = vsel %vm420, %v313, %v399
        %v447 = vsel %vm420, %v314, %v401
        %v451 = vsel %vm420, %v315, %v403
        %v455 = vsel %vm420, %v316, %v405
        %v459 = vsel %vm420, %v317, %v407
        %v463 = vsel %vm420, %v318, %v409
        %v467 = vsel %vm420, %v319, %v411
        %v471 = vsel %vm420, %v320, %v413
        %v475 = vsel %vm420, %v321, %v415
        %v479 = vsel %vm420, %v322, %v417
        %v483 = vsel %vm420, %v323, %v419
        %v485 = vld [vmem:[%s2] sm:$0xf]
        %v486 = vld [vmem:[%s2 + $0x4] sm:$0xf]
        %v487 = vld [vmem:[%s2 + $0x8] sm:$0xf]
        %v488 = vld [vmem:[%s2 + $0xc] sm:$0xf]
        %v489 = vld [vmem:[%s2 + $0x10] sm:$0xf]
        %v490 = vld [vmem:[%s2 + $0x14] sm:$0xf]
        %v491 = vld [vmem:[%s2 + $0x18] sm:$0xf]
        %v492 = vld [vmem:[%s2 + $0x1c] sm:$0xf]
        %v493 = vld [vmem:[%s2 + $0x20] sm:$0xf]
        %v494 = vld [vmem:[%s2 + $0x24] sm:$0xf]
        %v495 = vld [vmem:[%s2 + $0x28] sm:$0xf]
        %v496 = vld [vmem:[%s2 + $0x2c] sm:$0xf]
        %v497 = vld [vmem:[%s2 + $0x30] sm:$0xf]
        %v498 = vld [vmem:[%s2 + $0x34] sm:$0xf]
        %v499 = vld [vmem:[%s2 + $0x38] sm:$0xf]
        %v500 = vld [vmem:[%s2 + $0x3c] sm:$0xf]
        %v501 = vld [vmem:[%s3] sm:$0x1]
        %v503 = vlaneseq
        %v504 = vshrl.u32 %v503, 7
        %v505 = vsub.s32 0, %v504
        %v506 = vrot.slane %v501, %v505
        %v524 = vunpack.c.l.b16 %v485
        %v525 = vunpack.c.l.b16 %v486
        %v526 = vunpack.c.l.b16 %v487
        %v527 = vunpack.c.l.b16 %v488
        %v528 = vunpack.c.l.b16 %v489
        %v529 = vunpack.c.l.b16 %v490
        %v530 = vunpack.c.l.b16 %v491
        %v531 = vunpack.c.l.b16 %v492
        %v532 = vunpack.c.l.b16 %v493
        %v533 = vunpack.c.l.b16 %v494
        %v534 = vunpack.c.l.b16 %v495
        %v535 = vunpack.c.l.b16 %v496
        %v536 = vunpack.c.l.b16 %v497
        %v537 = vunpack.c.l.b16 %v498
        %v538 = vunpack.c.l.b16 %v499
        %v539 = vunpack.c.l.b16 %v500
        %v540 = vpack.c.b16 %v525, %v524
        %v541 = vpack.c.b16 %v527, %v526
        %v542 = vpack.c.b16 %v529, %v528
        %v543 = vpack.c.b16 %v531, %v530
        %v544 = vpack.c.b16 %v533, %v532
        %v545 = vpack.c.b16 %v535, %v534
        %v546 = vpack.c.b16 %v537, %v536
        %v547 = vpack.c.b16 %v539, %v538
        %556 = vmatprep.subr.bf16.mxu0 0
        %557 = vmatpush1.bf16.msra.mxu0 %v540
        %558 = vmatprep.subr.bf16.mxu0 0
        %559 = vmatpush1.bf16.msra.mxu0 %v541
        %560 = vmatprep.subr.bf16.mxu0 0
        %561 = vmatpush1.bf16.msra.mxu0 %v542
        %562 = vmatprep.subr.bf16.mxu0 0
        %563 = vmatpush1.bf16.msra.mxu0 %v543
        %564 = vmatprep.subr.bf16.mxu0 0
        %565 = vmatpush1.bf16.msra.mxu0 %v544
        %566 = vmatprep.subr.bf16.mxu0 0
        %567 = vmatpush1.bf16.msra.mxu0 %v545
        %568 = vmatprep.subr.bf16.mxu0 0
        %569 = vmatpush1.bf16.msra.mxu0 %v546
        %570 = vmatprep.subr.bf16.mxu0 0
        %571 = vmatpush1.bf16.msra.mxu0 %v547
        %572 = vmatprep.subr.bf16.mxu0 0
        %573 = vmatpush1.bf16.msra.mxu0 0
        %574 = vmatprep.subr.bf16.mxu0 0
        %575 = vmatpush1.bf16.msra.mxu0 0
        %576 = vmatprep.subr.bf16.mxu0 0
        %577 = vmatpush1.bf16.msra.mxu0 0
        %578 = vmatprep.subr.bf16.mxu0 0
        %579 = vmatpush1.bf16.msra.mxu0 0
        %580 = vmatprep.subr.bf16.mxu0 0
        %581 = vmatpush1.bf16.msra.mxu0 0
        %582 = vmatprep.subr.bf16.mxu0 0
        %583 = vmatpush1.bf16.msra.mxu0 0
        %584 = vmatprep.subr.bf16.mxu0 0
        %585 = vmatpush1.bf16.msra.mxu0 0
        %586 = vmatprep.subr.bf16.mxu0 0
        %587 = vmatpush1.bf16.msra.mxu0 0
        %588 = vmatprep.mubr.bf16.mxu0 0
        %589 = vmatmul.mubr.bf16.gmra.mrb[0].mxu0 %v423
        %v590 = vpop.f32.mrb[0].mxu0
        %v591 = vadd.f32 %v506, %v590
        %v592 = vpop.f32.mrb[0].mxu0
        %v593 = vpop.f32.mrb[0].mxu0
        %v594 = vadd.f32 %v506, %v593
        %v595 = vpop.f32.mrb[0].mxu0
        %596 = vmatprep.mubr.bf16.mxu0 0
        %597 = vmatmul.mubr.bf16.gmra.mrb[0].mxu0 %v427
        %v598 = vpop.f32.mrb[0].mxu0
        %v599 = vadd.f32 %v506, %v598
        %v600 = vpop.f32.mrb[0].mxu0
        %v601 = vpop.f32.mrb[0].mxu0
        %v602 = vadd.f32 %v506, %v601
        %v603 = vpop.f32.mrb[0].mxu0
        %604 = vmatprep.mubr.bf16.mxu0 0
        %605 = vmatmul.mubr.bf16.gmra.mrb[0].mxu0 %v431
        %v606 = vpop.f32.mrb[0].mxu0
        %v607 = vadd.f32 %v506, %v606
        %v608 = vpop.f32.mrb[0].mxu0
        %v609 = vpop.f32.mrb[0].mxu0
        %v610 = vadd.f32 %v506, %v609
        %v611 = vpop.f32.mrb[0].mxu0
        %612 = vmatprep.mubr.bf16.mxu0 0
        %613 = vmatmul.mubr.bf16.gmra.mrb[0].mxu0 %v435
        %v614 = vpop.f32.mrb[0].mxu0
        %v615 = vadd.f32 %v506, %v614
        %v616 = vpop.f32.mrb[0].mxu0
        %v617 = vpop.f32.mrb[0].mxu0
        %v618 = vadd.f32 %v506, %v617
        %v619 = vpop.f32.mrb[0].mxu0
        %620 = vmatprep.mubr.bf16.mxu0 0
        %621 = vmatmul.mubr.bf16.gmra.mrb[0].mxu0 %v439
        %v622 = vpop.f32.mrb[0].mxu0
        %v623 = vadd.f32 %v506, %v622
        %v624 = vpop.f32.mrb[0].mxu0
        %v625 = vpop.f32.mrb[0].mxu0
        %v626 = vadd.f32 %v506, %v625
        %v627 = vpop.f32.mrb[0].mxu0
        %628 = vmatprep.mubr.bf16.mxu0 0
        %629 = vmatmul.mubr.bf16.gmra.mrb[0].mxu0 %v443
        %v630 = vpop.f32.mrb[0].mxu0
        %v631 = vadd.f32 %v506, %v630
        %v632 = vpop.f32.mrb[0].mxu0
        %v633 = vpop.f32.mrb[0].mxu0
        %v634 = vadd.f32 %v506, %v633
        %v635 = vpop.f32.mrb[0].mxu0
        %636 = vmatprep.mubr.bf16.mxu0 0
        %637 = vmatmul.mubr.bf16.gmra.mrb[0].mxu0 %v447
        %v638 = vpop.f32.mrb[0].mxu0
        %v639 = vadd.f32 %v506, %v638
        %v640 = vpop.f32.mrb[0].mxu0
        %v641 = vpop.f32.mrb[0].mxu0
        %v642 = vadd.f32 %v506, %v641
        %v643 = vpop.f32.mrb[0].mxu0
        %644 = vmatprep.mubr.bf16.mxu0 0
        %645 = vmatmul.mubr.bf16.gmra.mrb[0].mxu0 %v451
        %v646 = vpop.f32.mrb[0].mxu0
        %v647 = vadd.f32 %v506, %v646
        %v648 = vpop.f32.mrb[0].mxu0
        %v649 = vpop.f32.mrb[0].mxu0
        %v650 = vadd.f32 %v506, %v649
        %v651 = vpop.f32.mrb[0].mxu0
        %652 = vmatprep.mubr.bf16.mxu0 0
        %653 = vmatmul.mubr.bf16.gmra.mrb[0].mxu0 %v455
        %v654 = vpop.f32.mrb[0].mxu0
        %v655 = vadd.f32 %v506, %v654
        %v656 = vpop.f32.mrb[0].mxu0
        %v657 = vpop.f32.mrb[0].mxu0
        %v658 = vadd.f32 %v506, %v657
        %v659 = vpop.f32.mrb[0].mxu0
        %660 = vmatprep.mubr.bf16.mxu0 0
        %661 = vmatmul.mubr.bf16.gmra.mrb[0].mxu0 %v459
        %v662 = vpop.f32.mrb[0].mxu0
        %v663 = vadd.f32 %v506, %v662
        %v664 = vpop.f32.mrb[0].mxu0
        %v665 = vpop.f32.mrb[0].mxu0
        %v666 = vadd.f32 %v506, %v665
        %v667 = vpop.f32.mrb[0].mxu0
        %668 = vmatprep.mubr.bf16.mxu0 0
        %669 = vmatmul.mubr.bf16.gmra.mrb[0].mxu0 %v463
        %v670 = vpop.f32.mrb[0].mxu0
        %v671 = vadd.f32 %v506, %v670
        %v672 = vpop.f32.mrb[0].mxu0
        %v673 = vpop.f32.mrb[0].mxu0
        %v674 = vadd.f32 %v506, %v673
        %v675 = vpop.f32.mrb[0].mxu0
        %676 = vmatprep.mubr.bf16.mxu0 0
        %677 = vmatmul.mubr.bf16.gmra.mrb[0].mxu0 %v467
        %v678 = vpop.f32.mrb[0].mxu0
        %v679 = vadd.f32 %v506, %v678
        %v680 = vpop.f32.mrb[0].mxu0
        %v681 = vpop.f32.mrb[0].mxu0
        %v682 = vadd.f32 %v506, %v681
        %v683 = vpop.f32.mrb[0].mxu0
        %684 = vmatprep.mubr.bf16.mxu0 0
        %685 = vmatmul.mubr.bf16.gmra.mrb[0].mxu0 %v471
        %v686 = vpop.f32.mrb[0].mxu0
        %v687 = vadd.f32 %v506, %v686
        %v688 = vpop.f32.mrb[0].mxu0
        %v689 = vpop.f32.mrb[0].mxu0
        %v690 = vadd.f32 %v506, %v689
        %v691 = vpop.f32.mrb[0].mxu0
        %692 = vmatprep.mubr.bf16.mxu0 0
        %693 = vmatmul.mubr.bf16.gmra.mrb[0].mxu0 %v475
        %v694 = vpop.f32.mrb[0].mxu0
        %v695 = vadd.f32 %v506, %v694
        %v696 = vpop.f32.mrb[0].mxu0
        %v697 = vpop.f32.mrb[0].mxu0
        %v698 = vadd.f32 %v506, %v697
        %v699 = vpop.f32.mrb[0].mxu0
        %700 = vmatprep.mubr.bf16.mxu0 0
        %701 = vmatmul.mubr.bf16.gmra.mrb[0].mxu0 %v479
        %v702 = vpop.f32.mrb[0].mxu0
        %v703 = vadd.f32 %v506, %v702
        %v704 = vpop.f32.mrb[0].mxu0
        %v705 = vpop.f32.mrb[0].mxu0
        %v706 = vadd.f32 %v506, %v705
        %v707 = vpop.f32.mrb[0].mxu0
        %708 = vmatprep.mubr.bf16.mxu0 0
        %709 = vmatmul.mubr.bf16.gmra.mrb[0].mxu0 %v483
        %v710 = vpop.f32.mrb[0].mxu0
        %v711 = vadd.f32 %v506, %v710
        %v712 = vpop.f32.mrb[0].mxu0
        %v713 = vpop.f32.mrb[0].mxu0
        %v714 = vadd.f32 %v506, %v713
        %v715 = vpop.f32.mrb[0].mxu0
        %716 = vdwg.mxu0
        %v717 = vmax.f32 %v591, 0.0
        %v718 = vmax.f32 %v594, 0.0
        %v719 = vmax.f32 %v599, 0.0
        %v720 = vmax.f32 %v602, 0.0
        %v721 = vmax.f32 %v607, 0.0
        %v722 = vmax.f32 %v610, 0.0
        %v723 = vmax.f32 %v615, 0.0
        %v724 = vmax.f32 %v618, 0.0
        %v725 = vmax.f32 %v623, 0.0
        %v726 = vmax.f32 %v626, 0.0
        %v727 = vmax.f32 %v631, 0.0
        %v728 = vmax.f32 %v634, 0.0
        %v729 = vmax.f32 %v639, 0.0
        %v730 = vmax.f32 %v642, 0.0
        %v731 = vmax.f32 %v647, 0.0
        %v732 = vmax.f32 %v650, 0.0
        %v733 = vmax.f32 %v655, 0.0
        %v734 = vmax.f32 %v658, 0.0
        %v735 = vmax.f32 %v663, 0.0
        %v736 = vmax.f32 %v666, 0.0
        %v737 = vmax.f32 %v671, 0.0
        %v738 = vmax.f32 %v674, 0.0
        %v739 = vmax.f32 %v679, 0.0
        %v740 = vmax.f32 %v682, 0.0
        %v741 = vmax.f32 %v687, 0.0
        %v742 = vmax.f32 %v690, 0.0
        %v743 = vmax.f32 %v695, 0.0
        %v744 = vmax.f32 %v698, 0.0
        %v745 = vmax.f32 %v703, 0.0
        %v746 = vmax.f32 %v706, 0.0
        %v747 = vmax.f32 %v711, 0.0
        %v748 = vmax.f32 %v714, 0.0
        %v749 = vpack.c.bf16 %v718, %v717
        %v750 = vpack.c.bf16 %v720, %v719
        %v751 = vpack.c.bf16 %v722, %v721
        %v752 = vpack.c.bf16 %v724, %v723
        %v753 = vpack.c.bf16 %v726, %v725
        %v754 = vpack.c.bf16 %v728, %v727
        %v755 = vpack.c.bf16 %v730, %v729
        %v756 = vpack.c.bf16 %v732, %v731
        %v757 = vpack.c.bf16 %v734, %v733
        %v758 = vpack.c.bf16 %v736, %v735
        %v759 = vpack.c.bf16 %v738, %v737
        %v760 = vpack.c.bf16 %v740, %v739
        %v761 = vpack.c.bf16 %v742, %v741
        %v762 = vpack.c.bf16 %v744, %v743
        %v763 = vpack.c.bf16 %v746, %v745
        %v764 = vpack.c.bf16 %v748, %v747
        %v765 = vld [vmem:[%s4] sm:$0xf]
        %v766 = vld [vmem:[%s4 + $0x4] sm:$0xf]
        %v767 = vld [vmem:[%s4 + $0x8] sm:$0xf]
        %v768 = vld [vmem:[%s4 + $0xc] sm:$0xf]
        %v769 = vld [vmem:[%s4 + $0x10] sm:$0xf]
        %v770 = vld [vmem:[%s4 + $0x14] sm:$0xf]
        %v771 = vld [vmem:[%s4 + $0x18] sm:$0xf]
        %v772 = vld [vmem:[%s4 + $0x1c] sm:$0xf]
        %v773 = vld [vmem:[%s4 + $0x20] sm:$0xf]
        %v774 = vld [vmem:[%s4 + $0x24] sm:$0xf]
        %v775 = vld [vmem:[%s4 + $0x28] sm:$0xf]
        %v776 = vld [vmem:[%s4 + $0x2c] sm:$0xf]
        %v777 = vld [vmem:[%s4 + $0x30] sm:$0xf]
        %v778 = vld [vmem:[%s4 + $0x34] sm:$0xf]
        %v779 = vld [vmem:[%s4 + $0x38] sm:$0xf]
        %v780 = vld [vmem:[%s4 + $0x3c] sm:$0xf]
        %v781 = vld [vmem:[%s5] sm:$0x1]
        %v783 = vlaneseq
        %v784 = vshrl.u32 %v783, 7
        %v785 = vsub.s32 0, %v784
        %v786 = vrot.slane %v781, %v785
        %v804 = vunpack.c.l.b16 %v765
        %v805 = vunpack.c.l.b16 %v766
        %v806 = vunpack.c.l.b16 %v767
        %v807 = vunpack.c.l.b16 %v768
        %v808 = vunpack.c.l.b16 %v769
        %v809 = vunpack.c.l.b16 %v770
        %v810 = vunpack.c.l.b16 %v771
        %v811 = vunpack.c.l.b16 %v772
        %v812 = vunpack.c.l.b16 %v773
        %v813 = vunpack.c.l.b16 %v774
        %v814 = vunpack.c.l.b16 %v775
        %v815 = vunpack.c.l.b16 %v776
        %v816 = vunpack.c.l.b16 %v777
        %v817 = vunpack.c.l.b16 %v778
        %v818 = vunpack.c.l.b16 %v779
        %v819 = vunpack.c.l.b16 %v780
        %v820 = vpack.c.b16 %v805, %v804
        %v821 = vpack.c.b16 %v807, %v806
        %v822 = vpack.c.b16 %v809, %v808
        %v823 = vpack.c.b16 %v811, %v810
        %v824 = vpack.c.b16 %v813, %v812
        %v825 = vpack.c.b16 %v815, %v814
        %v826 = vpack.c.b16 %v817, %v816
        %v827 = vpack.c.b16 %v819, %v818
        %836 = vmatprep.subr.bf16.mxu0 0
        %837 = vmatpush1.bf16.msra.mxu0 %v820
        %838 = vmatprep.subr.bf16.mxu0 0
        %839 = vmatpush1.bf16.msra.mxu0 %v821
        %840 = vmatprep.subr.bf16.mxu0 0
        %841 = vmatpush1.bf16.msra.mxu0 %v822
        %842 = vmatprep.subr.bf16.mxu0 0
        %843 = vmatpush1.bf16.msra.mxu0 %v823
        %844 = vmatprep.subr.bf16.mxu0 0
        %845 = vmatpush1.bf16.msra.mxu0 %v824
        %846 = vmatprep.subr.bf16.mxu0 0
        %847 = vmatpush1.bf16.msra.mxu0 %v825
        %848 = vmatprep.subr.bf16.mxu0 0
        %849 = vmatpush1.bf16.msra.mxu0 %v826
        %850 = vmatprep.subr.bf16.mxu0 0
        %851 = vmatpush1.bf16.msra.mxu0 %v827
        %852 = vmatprep.subr.bf16.mxu0 0
        %853 = vmatpush1.bf16.msra.mxu0 0
        %854 = vmatprep.subr.bf16.mxu0 0
        %855 = vmatpush1.bf16.msra.mxu0 0
        %856 = vmatprep.subr.bf16.mxu0 0
        %857 = vmatpush1.bf16.msra.mxu0 0
        %858 = vmatprep.subr.bf16.mxu0 0
        %859 = vmatpush1.bf16.msra.mxu0 0
        %860 = vmatprep.subr.bf16.mxu0 0
        %861 = vmatpush1.bf16.msra.mxu0 0
        %862 = vmatprep.subr.bf16.mxu0 0
        %863 = vmatpush1.bf16.msra.mxu0 0
        %864 = vmatprep.subr.bf16.mxu0 0
        %865 = vmatpush1.bf16.msra.mxu0 0
        %866 = vmatprep.subr.bf16.mxu0 0
        %867 = vmatpush1.bf16.msra.mxu0 0
        %868 = vmatprep.mubr.bf16.mxu0 0
        %869 = vmatmul.mubr.bf16.gmra.mrb[0].mxu0 %v749
        %v870 = vpop.f32.mrb[0].mxu0
        %v871 = vadd.f32 %v786, %v870
        %v872 = vpop.f32.mrb[0].mxu0
        %v873 = vpop.f32.mrb[0].mxu0
        %v874 = vadd.f32 %v786, %v873
        %v875 = vpop.f32.mrb[0].mxu0
        %876 = vmatprep.mubr.bf16.mxu0 0
        %877 = vmatmul.mubr.bf16.gmra.mrb[0].mxu0 %v750
        %v878 = vpop.f32.mrb[0].mxu0
        %v879 = vadd.f32 %v786, %v878
        %v880 = vpop.f32.mrb[0].mxu0
        %v881 = vpop.f32.mrb[0].mxu0
        %v882 = vadd.f32 %v786, %v881
        %v883 = vpop.f32.mrb[0].mxu0
        %884 = vmatprep.mubr.bf16.mxu0 0
        %885 = vmatmul.mubr.bf16.gmra.mrb[0].mxu0 %v751
        %v886 = vpop.f32.mrb[0].mxu0
        %v887 = vadd.f32 %v786, %v886
        %v888 = vpop.f32.mrb[0].mxu0
        %v889 = vpop.f32.mrb[0].mxu0
        %v890 = vadd.f32 %v786, %v889
        %v891 = vpop.f32.mrb[0].mxu0
        %892 = vmatprep.mubr.bf16.mxu0 0
        %893 = vmatmul.mubr.bf16.gmra.mrb[0].mxu0 %v752
        %v894 = vpop.f32.mrb[0].mxu0
        %v895 = vadd.f32 %v786, %v894
        %v896 = vpop.f32.mrb[0].mxu0
        %v897 = vpop.f32.mrb[0].mxu0
        %v898 = vadd.f32 %v786, %v897
        %v899 = vpop.f32.mrb[0].mxu0
        %900 = vmatprep.mubr.bf16.mxu0 0
        %901 = vmatmul.mubr.bf16.gmra.mrb[0].mxu0 %v753
        %v902 = vpop.f32.mrb[0].mxu0
        %v903 = vadd.f32 %v786, %v902
        %v904 = vpop.f32.mrb[0].mxu0
        %v905 = vpop.f32.mrb[0].mxu0
        %v906 = vadd.f32 %v786, %v905
        %v907 = vpop.f32.mrb[0].mxu0
        %908 = vmatprep.mubr.bf16.mxu0 0
        %909 = vmatmul.mubr.bf16.gmra.mrb[0].mxu0 %v754
        %v910 = vpop.f32.mrb[0].mxu0
        %v911 = vadd.f32 %v786, %v910
        %v912 = vpop.f32.mrb[0].mxu0
        %v913 = vpop.f32.mrb[0].mxu0
        %v914 = vadd.f32 %v786, %v913
        %v915 = vpop.f32.mrb[0].mxu0
        %916 = vmatprep.mubr.bf16.mxu0 0
        %917 = vmatmul.mubr.bf16.gmra.mrb[0].mxu0 %v755
        %v918 = vpop.f32.mrb[0].mxu0
        %v919 = vadd.f32 %v786, %v918
        %v920 = vpop.f32.mrb[0].mxu0
        %v921 = vpop.f32.mrb[0].mxu0
        %v922 = vadd.f32 %v786, %v921
        %v923 = vpop.f32.mrb[0].mxu0
        %924 = vmatprep.mubr.bf16.mxu0 0
        %925 = vmatmul.mubr.bf16.gmra.mrb[0].mxu0 %v756
        %v926 = vpop.f32.mrb[0].mxu0
        %v927 = vadd.f32 %v786, %v926
        %v928 = vpop.f32.mrb[0].mxu0
        %v929 = vpop.f32.mrb[0].mxu0
        %v930 = vadd.f32 %v786, %v929
        %v931 = vpop.f32.mrb[0].mxu0
        %932 = vmatprep.mubr.bf16.mxu0 0
        %933 = vmatmul.mubr.bf16.gmra.mrb[0].mxu0 %v757
        %v934 = vpop.f32.mrb[0].mxu0
        %v935 = vadd.f32 %v786, %v934
        %v936 = vpop.f32.mrb[0].mxu0
        %v937 = vpop.f32.mrb[0].mxu0
        %v938 = vadd.f32 %v786, %v937
        %v939 = vpop.f32.mrb[0].mxu0
        %940 = vmatprep.mubr.bf16.mxu0 0
        %941 = vmatmul.mubr.bf16.gmra.mrb[0].mxu0 %v758
        %v942 = vpop.f32.mrb[0].mxu0
        %v943 = vadd.f32 %v786, %v942
        %v944 = vpop.f32.mrb[0].mxu0
        %v945 = vpop.f32.mrb[0].mxu0
        %v946 = vadd.f32 %v786, %v945
        %v947 = vpop.f32.mrb[0].mxu0
        %948 = vmatprep.mubr.bf16.mxu0 0
        %949 = vmatmul.mubr.bf16.gmra.mrb[0].mxu0 %v759
        %v950 = vpop.f32.mrb[0].mxu0
        %v951 = vadd.f32 %v786, %v950
        %v952 = vpop.f32.mrb[0].mxu0
        %v953 = vpop.f32.mrb[0].mxu0
        %v954 = vadd.f32 %v786, %v953
        %v955 = vpop.f32.mrb[0].mxu0
        %956 = vmatprep.mubr.bf16.mxu0 0
        %957 = vmatmul.mubr.bf16.gmra.mrb[0].mxu0 %v760
        %v958 = vpop.f32.mrb[0].mxu0
        %v959 = vadd.f32 %v786, %v958
        %v960 = vpop.f32.mrb[0].mxu0
        %v961 = vpop.f32.mrb[0].mxu0
        %v962 = vadd.f32 %v786, %v961
        %v963 = vpop.f32.mrb[0].mxu0
        %964 = vmatprep.mubr.bf16.mxu0 0
        %965 = vmatmul.mubr.bf16.gmra.mrb[0].mxu0 %v761
        %v966 = vpop.f32.mrb[0].mxu0
        %v967 = vadd.f32 %v786, %v966
        %v968 = vpop.f32.mrb[0].mxu0
        %v969 = vpop.f32.mrb[0].mxu0
        %v970 = vadd.f32 %v786, %v969
        %v971 = vpop.f32.mrb[0].mxu0
        %972 = vmatprep.mubr.bf16.mxu0 0
        %973 = vmatmul.mubr.bf16.gmra.mrb[0].mxu0 %v762
        %v974 = vpop.f32.mrb[0].mxu0
        %v975 = vadd.f32 %v786, %v974
        %v976 = vpop.f32.mrb[0].mxu0
        %v977 = vpop.f32.mrb[0].mxu0
        %v978 = vadd.f32 %v786, %v977
        %v979 = vpop.f32.mrb[0].mxu0
        %980 = vmatprep.mubr.bf16.mxu0 0
        %981 = vmatmul.mubr.bf16.gmra.mrb[0].mxu0 %v763
        %v982 = vpop.f32.mrb[0].mxu0
        %v983 = vadd.f32 %v786, %v982
        %v984 = vpop.f32.mrb[0].mxu0
        %v985 = vpop.f32.mrb[0].mxu0
        %v986 = vadd.f32 %v786, %v985
        %v987 = vpop.f32.mrb[0].mxu0
        %988 = vmatprep.mubr.bf16.mxu0 0
        %989 = vmatmul.mubr.bf16.gmra.mrb[0].mxu0 %v764
        %v990 = vpop.f32.mrb[0].mxu0
        %v991 = vadd.f32 %v786, %v990
        %v992 = vpop.f32.mrb[0].mxu0
        %v993 = vpop.f32.mrb[0].mxu0
        %v994 = vadd.f32 %v786, %v993
        %v995 = vpop.f32.mrb[0].mxu0
        %996 = vdwg.mxu0
        %v997 = vmax.f32 %v871, 0.0
        %v998 = vmax.f32 %v874, 0.0
        %v999 = vmax.f32 %v879, 0.0
        %v1000 = vmax.f32 %v882, 0.0
        %v1001 = vmax.f32 %v887, 0.0
        %v1002 = vmax.f32 %v890, 0.0
        %v1003 = vmax.f32 %v895, 0.0
        %v1004 = vmax.f32 %v898, 0.0
        %v1005 = vmax.f32 %v903, 0.0
        %v1006 = vmax.f32 %v906, 0.0
        %v1007 = vmax.f32 %v911, 0.0
        %v1008 = vmax.f32 %v914, 0.0
        %v1009 = vmax.f32 %v919, 0.0
        %v1010 = vmax.f32 %v922, 0.0
        %v1011 = vmax.f32 %v927, 0.0
        %v1012 = vmax.f32 %v930, 0.0
        %v1013 = vmax.f32 %v935, 0.0
        %v1014 = vmax.f32 %v938, 0.0
        %v1015 = vmax.f32 %v943, 0.0
        %v1016 = vmax.f32 %v946, 0.0
        %v1017 = vmax.f32 %v951, 0.0
        %v1018 = vmax.f32 %v954, 0.0
        %v1019 = vmax.f32 %v959, 0.0
        %v1020 = vmax.f32 %v962, 0.0
        %v1021 = vmax.f32 %v967, 0.0
        %v1022 = vmax.f32 %v970, 0.0
        %v1023 = vmax.f32 %v975, 0.0
        %v1024 = vmax.f32 %v978, 0.0
        %v1025 = vmax.f32 %v983, 0.0
        %v1026 = vmax.f32 %v986, 0.0
        %v1027 = vmax.f32 %v991, 0.0
        %v1028 = vmax.f32 %v994, 0.0
        %1029 = vst [vmem:[%s261] sm:$0xff] %v997
        %1030 = vst [vmem:[%s261 + $0x8] sm:$0xff] %v998
        %1031 = vst [vmem:[%s261 + $0x10] sm:$0xff] %v999
        %1032 = vst [vmem:[%s261 + $0x18] sm:$0xff] %v1000
        %1033 = vst [vmem:[%s261 + $0x20] sm:$0xff] %v1001
        %1034 = vst [vmem:[%s261 + $0x28] sm:$0xff] %v1002
        %1035 = vst [vmem:[%s261 + $0x30] sm:$0xff] %v1003
        %1036 = vst [vmem:[%s261 + $0x38] sm:$0xff] %v1004
        %1037 = vst [vmem:[%s261 + $0x40] sm:$0xff] %v1005
        %1038 = vst [vmem:[%s261 + $0x48] sm:$0xff] %v1006
        %1039 = vst [vmem:[%s261 + $0x50] sm:$0xff] %v1007
        %1040 = vst [vmem:[%s261 + $0x58] sm:$0xff] %v1008
        %1041 = vst [vmem:[%s261 + $0x60] sm:$0xff] %v1009
        %1042 = vst [vmem:[%s261 + $0x68] sm:$0xff] %v1010
        %1043 = vst [vmem:[%s261 + $0x70] sm:$0xff] %v1011
        %1044 = vst [vmem:[%s261 + $0x78] sm:$0xff] %v1012
        %1045 = vst [vmem:[%s261 + $0x80] sm:$0xff] %v1013
        %1046 = vst [vmem:[%s261 + $0x88] sm:$0xff] %v1014
        %1047 = vst [vmem:[%s261 + $0x90] sm:$0xff] %v1015
        %1048 = vst [vmem:[%s261 + $0x98] sm:$0xff] %v1016
        %1049 = vst [vmem:[%s261 + $0xa0] sm:$0xff] %v1017
        %1050 = vst [vmem:[%s261 + $0xa8] sm:$0xff] %v1018
        %1051 = vst [vmem:[%s261 + $0xb0] sm:$0xff] %v1019
        %1052 = vst [vmem:[%s261 + $0xb8] sm:$0xff] %v1020
        %1053 = vst [vmem:[%s261 + $0xc0] sm:$0xff] %v1021
        %1054 = vst [vmem:[%s261 + $0xc8] sm:$0xff] %v1022
        %1055 = vst [vmem:[%s261 + $0xd0] sm:$0xff] %v1023
        %1056 = vst [vmem:[%s261 + $0xd8] sm:$0xff] %v1024
        %1057 = vst [vmem:[%s261 + $0xe0] sm:$0xff] %v1025
        %1058 = vst [vmem:[%s261 + $0xe8] sm:$0xff] %v1026
        %1059 = vst [vmem:[%s261 + $0xf0] sm:$0xff] %v1027
        %1060 = vst [vmem:[%s261 + $0xf8] sm:$0xff] %v1028
        %s1061 = sand.u32 %s164, 1
        %s1062 = scalar_lea.sflag [#allocation3], %s1061
        %s1063 = sand.u32 %s164, 1
        %s1064 = smul.addr %s1063, 256
        %s1065 = scalar_lea.vmem [#allocation2], %s1064
        // Predicated region
        $region45: #{tpu_custom_call.1} parent=43 // pred_check
          %p1066 = pneg %p174
        $region46: #{tpu_custom_call.1} parent=43 // pred_check_branch
          %1068 = sbr.rel (%p1066) target = $region48
        $region47: #{tpu_custom_call.1} parent=43 // pred_region
          %s1069 = smul.u32 32, %s20
          %s1071 = ssub.s32 4096, 4096
          %1072 = vsyncadd %s1062, %s1071
          %s1073 = smul.addr %s1069, 128
          %s1074 = scalar_lea.hbm %s6, %s1073
          %s1075 = sshll.u32 %s1065, 4
          %s1076 = int_to_ptr.vmem [resolvable:$true] %s1075
          %1081 = dma.vmem_to_hbm [thread:$0]  %s1076, 4096, %s1074, %s1062, 128, 128, 8
        $region48: #{tpu_custom_call.1} parent=43 // pred_fallthru
          _
      $region44: #{tpu_custom_call.1} parent=5 // pred_fallthru
        _
      %p1082 = scmp.le.s32.totalorder 2, %s15
      // Predicated region
      $region49: #{tpu_custom_call.1} parent=5 // pred_check
        %p1083 = pneg %p1082
      $region50: #{tpu_custom_call.1} parent=5 // pred_check_branch
        %1085 = sbr.rel (%p1083) target = $region52
      $region51: #{tpu_custom_call.1} parent=5 // pred_region
        %s1086 = ssub.s32 %s15, 2
        // Predicated region
        $region53: #{tpu_custom_call.1} parent=51 // pred_check
          %p1087 = pneg %p180
        $region54: #{tpu_custom_call.1} parent=51 // pred_check_branch
          %1089 = sbr.rel (%p1087) target = $region56
        $region55: #{tpu_custom_call.1} parent=51 // pred_region
          %s1090 = sand.u32 %s165, 1
          %s1091 = scalar_lea.sflag [#allocation3], %s1090
          %s1092 = sand.u32 %s165, 1
          %s1093 = smul.addr %s1092, 256
          %s1094 = scalar_lea.vmem [#allocation2], %s1093
          %1095 = dma.done %s1091, 4096
        $region56: #{tpu_custom_call.1} parent=51 // pred_fallthru
          _
      $region52: #{tpu_custom_call.1} parent=5 // pred_fallthru
        _
    $region6: #{tpu_custom_call.1} parent=1 // loop_footer
      %s19 = sadd.s32 1, %s15
    $region7: #{tpu_custom_call.1} parent=1 // loop_footer_branch
      %14 = sbr.rel target = $region3
    $region8: #{tpu_custom_call.1} parent=1 // loop_exit
      _
    %1096 = vsyncpa [#allocation3], 1
    %s1097 = scalar_lea.sflag [#allocation3], 1
    %1098 = vsyncpa %s1097, 1

</llo_original>
